<compile_context>
chip_gen: v5e
topology: v5e:2x2
jax: 0.10.0
libtpu: 0.0.40
codegen_flags: <defaults>
</compile_context>

<pallas_src>
import math

import jax
import jax.numpy as jnp
from jax.experimental import pallas as pl
from jax.experimental.pallas import tpu as pltpu


def _round_up(x, m):
    return ((x + m - 1) // m) * m


# --------------------------------------------------------------------------- #
# Kernel
# --------------------------------------------------------------------------- #
def _make_kernel(*, tk, resident, features_dim, dfeat):
    """Build the fused backbone+head+normalize kernel.

    Grid = (batch tiles ["parallel"], K tiles over per-view features ["arbitrary"]).
      s1_ref/s2_ref : (tm, tk)            flattened image tiles (native dtype)
      doy_ref       : (tm, 1)   f32       per-sample scalar
      wb1/wb2       : resident (Ks_pad, Dbb) or streamed (tk, Dbb), bf16
      wdoy, bb      : (1, Dbb)  f32       doy weight row / backbone bias
      w1,b1,w2,b2   : head params (bf16 weights, f32 biases), padded to 128
      o_ref         : (tm, Dfeat) f32     L2-normalized features
      acc_ref       : (tm, Dbb)  f32 VMEM accumulator (persists across K tiles)
    """

    def kernel(s1_ref, s2_ref, doy_ref, wb1_ref, wb2_ref, wdoy_ref, bb_ref,
               w1_ref, b1_ref, w2_ref, b2_ref, o_ref, acc_ref):
        k = pl.program_id(1)

        @pl.when(k == 0)
        def _init():
            # backbone bias + per-sample doy rank-1 contribution.
            acc_ref[...] = bb_ref[...] + doy_ref[...] * wdoy_ref[...]

        # Per-tile cast to bf16 (keeps HBM traffic to a single read of the
        # activations; no standalone wrapper-side astype pass).
        s1 = s1_ref[...].astype(jnp.bfloat16)
        s2 = s2_ref[...].astype(jnp.bfloat16)

        if resident:
            off = pl.multiple_of(k * tk, 128)
            wb1 = wb1_ref[pl.ds(off, tk), :]
            wb2 = wb2_ref[pl.ds(off, tk), :]
        else:
            wb1 = wb1_ref[...]
            wb2 = wb2_ref[...]

        # Two separate accumulates (avoids an extra (tm, Dbb) f32 temporary).
        acc_ref[...] += jnp.dot(s1, wb1, preferred_element_type=jnp.float32)
        acc_ref[...] += jnp.dot(s2, wb2, preferred_element_type=jnp.float32)

        @pl.when(k == pl.num_programs(1) - 1)
        def _finalize():
            # Backbone ReLU (f32 elementwise: safe on v5e too).
            h = jnp.maximum(acc_ref[...], 0.0)
            # Contrastive head: Linear -> ReLU -> Linear, f32 accumulation.
            z = jnp.dot(h.astype(jnp.bfloat16), w1_ref[...],
                        preferred_element_type=jnp.float32) + b1_ref[...]
            z = jnp.maximum(z, 0.0)
            f = jnp.dot(z.astype(jnp.bfloat16), w2_ref[...],
                        preferred_element_type=jnp.float32) + b2_ref[...]
            if features_dim < dfeat:
                # Zero padded feature lanes so the L2 norm matches
                # F.normalize(features[:, :features_dim], dim=1).
                lane = jax.lax.broadcasted_iota(jnp.int32, f.shape, 1)
                f = jnp.where(lane < features_dim, f, 0.0)
            # F.normalize(dim=1): rsqrt (EUP) + multiply (VPU).
            sq = jnp.sum(f * f, axis=-1, keepdims=True)
            inv = jax.lax.rsqrt(jnp.maximum(sq, 1e-24))
            o_ref[...] = (f * inv).astype(o_ref.dtype)

    return kernel


# --------------------------------------------------------------------------- #
# Tiling / VMEM-budget heuristics
# --------------------------------------------------------------------------- #
_RESIDENT_WEIGHT_BUDGET = 8 * 1024 * 1024  # wb1+wb2 bf16 bytes to stay resident


def _choose_tiling(B, Ks, Dbb, Dfeat, act_itemsize):
    # Generation-aware VMEM budget: ~48 MiB on v7x (64 MiB/TC), ~96 MiB on
    # v5e/v6e (128 MiB physical).
    try:
        info = pltpu.get_tpu_info()
        vmem_cap = int(getattr(info, "vmem_capacity_bytes", 64 * 1024 * 1024))
    except Exception:  # pragma: no cover - conservative fallback
        vmem_cap = 64 * 1024 * 1024
    vmem_budget = min(vmem_cap * 3 // 4, 96 * 1024 * 1024)

    def resident_for(kpad):
        return (2 * kpad * Dbb * 2) <= _RESIDENT_WEIGHT_BUDGET

    def working_set(tm_, tk_):
        kpad = _round_up(Ks, tk_)
        act = 2 * 2 * tm_ * tk_ * act_itemsize                 # s1+s2, 2x buffered
        if resident_for(kpad):
            wbb = 2 * 2 * kpad * Dbb * 2                       # resident (2 bufs, cons.)
        else:
            wbb = 2 * 2 * tk_ * Dbb * 2                        # streamed K-tiles
        head = 2 * 2 * (Dbb * Dbb + Dbb * Dfeat) + 2 * 4 * (3 * Dbb + Dfeat)
        fixed = 2 * tm_ * Dfeat * 4 + tm_ * Dbb * 4 + 2 * tm_ * 4
        return act + wbb + head + fixed

    # Batch tile: multiples of 16 (bf16 sublane packing).
    tm = 128 if B >= 128 else _round_up(B, 16)
    # v7x megacore: the "parallel" batch axis should have >= 2 tiles when possible.
    while _round_up(B, tm) // tm < 2 and tm >= 32:
        tm = max(16, _round_up(tm // 2, 16))

    # K tile: lane-dense, large (512-2048 reaches ~85% of HBM roofline).
    tk = min(2048, _round_up(Ks, 128))
    while working_set(tm, tk) > vmem_budget and tk > 128:
        tk = max(128, (tk // 2) // 128 * 128)
    while working_set(tm, tk) > vmem_budget and tm > 16:
        tm = max(16, _round_up(tm // 2, 16))

    kpad = _round_up(Ks, tk)
    resident = resident_for(kpad)
    # Streamed-weight fallback: amortize weight re-fetch over bigger batch tiles.
    if (not resident) and B >= 256 and tm < 256 and working_set(256, tk) <= vmem_budget:
        tm = 256

    return tm, tk, kpad, resident, vmem_budget


# --------------------------------------------------------------------------- #
# Forward wrapper
# --------------------------------------------------------------------------- #
def contrastive_forward(s1, s2, doy, params, features_dim=None):
    """Flatten NCHW views, tile over batch and feature-K, call fused kernel."""
    wb1, wb2, wdoy, bb, w1, b1, w2, b2 = params
    B = s1.shape[0]
    Ks = math.prod(s1.shape[1:])        # per-view flattened feature count (C*H*W)
    Dbb = wb1.shape[1]                  # padded backbone dim (multiple of 128)
    Dfeat = w2.shape[1]                 # padded features dim
    if features_dim is None:
        features_dim = Dfeat

    act_itemsize = jnp.dtype(s1.dtype).itemsize
    tm, tk, Ks_pad, resident, vmem_budget = _choose_tiling(
        B, Ks, Dbb, Dfeat, act_itemsize)

    # Activations stay in their native dtype (cast to bf16 per-tile in-kernel).
    s1f = s1.reshape(B, Ks)
    s2f = s2.reshape(B, Ks)
    doyf = doy.reshape(B, 1).astype(jnp.float32)

    B_pad = _round_up(B, tm)
    pad_b, pad_k = B_pad - B, Ks_pad - Ks
    if pad_b or pad_k:
        # Padded rows produce garbage-but-finite normalized vectors that are
        # sliced off below; padded K columns meet zero weight rows (exact math).
        # TODO(synk): for very large ragged inputs this pad pass could be
        # replaced by a pl.cdiv grid with masked edge handling.
        s1f = jnp.pad(s1f, ((0, pad_b), (0, pad_k)))
        s2f = jnp.pad(s2f, ((0, pad_b), (0, pad_k)))
        doyf = jnp.pad(doyf, ((0, pad_b), (0, 0)))
    if wb1.shape[0] != Ks_pad:
        wb1 = jnp.pad(wb1, ((0, Ks_pad - wb1.shape[0]), (0, 0)))
        wb2 = jnp.pad(wb2, ((0, Ks_pad - wb2.shape[0]), (0, 0)))

    grid = (B_pad // tm, Ks_pad // tk)

    if resident:
        # Weights DMA'd to VMEM once; constant index_map => no re-streaming
        # across batch tiles. Sliced per K-tile inside the kernel.
        wb_spec = pl.BlockSpec((Ks_pad, Dbb), lambda i, k: (0, 0))
    else:
        wb_spec = pl.BlockSpec((tk, Dbb), lambda i, k: (k, 0))

    kernel = _make_kernel(tk=tk, resident=resident,
                          features_dim=features_dim, dfeat=Dfeat)

    out = pl.pallas_call(
        kernel,
        out_shape=jax.ShapeDtypeStruct((B_pad, Dfeat), jnp.float32),
        grid_spec=pltpu.PrefetchScalarGridSpec(
            num_scalar_prefetch=0,
            grid=grid,
            in_specs=[
                pl.BlockSpec((tm, tk), lambda i, k: (i, k)),       # s1 tile
                pl.BlockSpec((tm, tk), lambda i, k: (i, k)),       # s2 tile
                pl.BlockSpec((tm, 1), lambda i, k: (i, 0)),        # doy
                wb_spec,                                           # wb1
                wb_spec,                                           # wb2
                pl.BlockSpec((1, Dbb), lambda i, k: (0, 0)),       # wdoy (resident)
                pl.BlockSpec((1, Dbb), lambda i, k: (0, 0)),       # bb   (resident)
                pl.BlockSpec((Dbb, Dbb), lambda i, k: (0, 0)),     # w1   (resident)
                pl.BlockSpec((1, Dbb), lambda i, k: (0, 0)),       # b1   (resident)
                pl.BlockSpec((Dbb, Dfeat), lambda i, k: (0, 0)),   # w2   (resident)
                pl.BlockSpec((1, Dfeat), lambda i, k: (0, 0)),     # b2   (resident)
            ],
            out_specs=pl.BlockSpec((tm, Dfeat), lambda i, k: (i, 0)),
            scratch_shapes=[pltpu.VMEM((tm, Dbb), jnp.float32)],
        ),
        compiler_params=pltpu.CompilerParams(
            dimension_semantics=("parallel", "arbitrary"),
            vmem_limit_bytes=int(vmem_budget),
        ),
    )(s1f, s2f, doyf, wb1, wb2, wdoy, bb, w1, b1, w2, b2)

    out = out[:B]
    if features_dim != Dfeat:
        out = out[:, :features_dim]
    return out


# --------------------------------------------------------------------------- #
# Params (synthetic backbone + MLP head), PyTorch-Linear-style init, padded
# --------------------------------------------------------------------------- #
def init_params(key, in_per_view, backbone_dim, features_dim, pad_to=128):
    """Weights bf16, biases/wdoy f32; backbone/hidden dims zero-padded to
    `pad_to` (lane-dense) so the math is identical to the unpadded model.
    Dbb is deliberately kept at 128 (HBM-bound kernel; no benefit padding to 256)."""
    hid = backbone_dim // 2
    dbb_pad = _round_up(max(backbone_dim, hid, pad_to), pad_to)
    dfeat_pad = _round_up(features_dim, pad_to)

    ks = jax.random.split(key, 8)

    def uni(k, shape, fan_in):
        bound = 1.0 / float(fan_in) ** 0.5
        return jax.random.uniform(k, shape, jnp.float32, -bound, bound)

    fan_bb = 2 * in_per_view + 1       # synthetic backbone sees (s1 | s2 | doy)
    wb1 = uni(ks[0], (in_per_view, backbone_dim), fan_bb)
    wb2 = uni(ks[1], (in_per_view, backbone_dim), fan_bb)
    wdoy = uni(ks[2], (1, backbone_dim), fan_bb)
    bb = uni(ks[3], (1, backbone_dim), fan_bb)
    w1 = uni(ks[4], (backbone_dim, hid), backbone_dim)
    b1 = uni(ks[5], (1, hid), backbone_dim)
    w2 = uni(ks[6], (hid, features_dim), hid)
    b2 = uni(ks[7], (1, features_dim), hid)

    def pad2(x, rows, cols):
        return jnp.pad(x, ((0, rows - x.shape[0]), (0, cols - x.shape[1])))

    return (
        pad2(wb1, in_per_view, dbb_pad).astype(jnp.bfloat16),
        pad2(wb2, in_per_view, dbb_pad).astype(jnp.bfloat16),
        pad2(wdoy, 1, dbb_pad),                          # f32
        pad2(bb, 1, dbb_pad),                            # f32
        pad2(w1, dbb_pad, dbb_pad).astype(jnp.bfloat16),
        pad2(b1, 1, dbb_pad),                            # f32
        pad2(w2, dbb_pad, dfeat_pad).astype(jnp.bfloat16),
        pad2(b2, 1, dfeat_pad),                          # f32
    )


def reference_forward(s1, s2, doy, params, features_dim):
    """Pure-JAX reference using the same (padded, bf16) params as the kernel."""
    wb1, wb2, wdoy, bb, w1, b1, w2, b2 = params
    B = s1.shape[0]
    s1f = s1.reshape(B, -1).astype(jnp.bfloat16)
    s2f = s2.reshape(B, -1).astype(jnp.bfloat16)
    doyf = doy.reshape(B, 1).astype(jnp.float32)

    h = (jnp.dot(s1f, wb1, preferred_element_type=jnp.float32)
         + jnp.dot(s2f, wb2, preferred_element_type=jnp.float32)
         + doyf * wdoy + bb)
    h = jnp.maximum(h, 0.0)
    z = jnp.maximum(
        jnp.dot(h.astype(jnp.bfloat16), w1, preferred_element_type=jnp.float32)
        + b1, 0.0)
    f = (jnp.dot(z.astype(jnp.bfloat16), w2, preferred_element_type=jnp.float32)
         + b2)[:, :features_dim]
    norm = jnp.sqrt(jnp.sum(f * f, axis=-1, keepdims=True))
    return f / jnp.maximum(norm, 1e-12)


if __name__ == "__main__":
    # Small shapes consistent with the module's forward(s1, s2, doy).
    B, C, H, W = 2, 4, 16, 16
    backbone_dim = 64       # backbone.out_dim (padded to 128 inside params)
    features_dim = 128      # default features_dim in the module

    key = jax.random.PRNGKey(0)
    k1, k2, k3, kp = jax.random.split(key, 4)

    s1 = jax.random.normal(k1, (B, C, H, W), jnp.float32)    # NCHW view 1
    s2 = jax.random.normal(k2, (B, C, H, W), jnp.float32)    # NCHW view 2
    doy = jax.random.uniform(k3, (B,), jnp.float32, 0.0, 365.0)

    in_per_view = C * H * W
    params = init_params(kp, in_per_view, backbone_dim, features_dim)

    out = contrastive_forward(s1, s2, doy, params, features_dim=features_dim)
    out = jax.block_until_ready(out)

    ref = reference_forward(s1, s2, doy, params, features_dim)
    assert out.shape == (B, features_dim)
    assert jnp.allclose(out, ref, atol=2e-3, rtol=2e-3), "mismatch vs reference"
    # Rows should be unit-norm.
    assert jnp.allclose(jnp.linalg.norm(out, axis=1), 1.0, atol=1e-3)

    print("KERNEL_OK")
</pallas_src>

<mosaic_0001>
module attributes {stable_mosaic.version = 11 : i64} {
  func.func @kernel(%arg0: i32, %arg1: i32, %arg2: memref<16x1024xf32, #tpu.memory_space<vmem>>, %arg3: memref<16x1024xf32, #tpu.memory_space<vmem>>, %arg4: memref<16x1xf32, #tpu.memory_space<vmem>>, %arg5: memref<1024x128xbf16, #tpu.memory_space<vmem>>, %arg6: memref<1024x128xbf16, #tpu.memory_space<vmem>>, %arg7: memref<1x128xf32, #tpu.memory_space<vmem>>, %arg8: memref<1x128xf32, #tpu.memory_space<vmem>>, %arg9: memref<128x128xbf16, #tpu.memory_space<vmem>>, %arg10: memref<1x128xf32, #tpu.memory_space<vmem>>, %arg11: memref<128x128xbf16, #tpu.memory_space<vmem>>, %arg12: memref<1x128xf32, #tpu.memory_space<vmem>>, %arg13: memref<16x128xf32, #tpu.memory_space<vmem>>, %arg14: memref<16x128xf32, #tpu.memory_space<vmem>>) attributes {dimension_semantics = [#tpu.dimension_semantics<parallel>, #tpu.dimension_semantics<arbitrary>], iteration_bounds = array<i64: 1, 1>, scalar_prefetch = 0 : i64, scratch_operands = 1 : i64, tpu.core_type = #tpu.core_type<tc>, window_params = [{transform_indices = @transform_0, window_bounds = array<i64: 16, 1024>}, {transform_indices = @transform_1, window_bounds = array<i64: 16, 1024>}, {transform_indices = @transform_2, window_bounds = array<i64: 16, 1>}, {pipeline_mode = #tpu.pipeline_mode<synchronous>, transform_indices = @transform_3, window_bounds = array<i64: 1024, 128>}, {pipeline_mode = #tpu.pipeline_mode<synchronous>, transform_indices = @transform_4, window_bounds = array<i64: 1024, 128>}, {pipeline_mode = #tpu.pipeline_mode<synchronous>, transform_indices = @transform_5, window_bounds = array<i64: 1, 128>}, {pipeline_mode = #tpu.pipeline_mode<synchronous>, transform_indices = @transform_6, window_bounds = array<i64: 1, 128>}, {pipeline_mode = #tpu.pipeline_mode<synchronous>, transform_indices = @transform_7, window_bounds = array<i64: 128, 128>}, {pipeline_mode = #tpu.pipeline_mode<synchronous>, transform_indices = @transform_8, window_bounds = array<i64: 1, 128>}, {pipeline_mode = #tpu.pipeline_mode<synchronous>, transform_indices = @transform_9, window_bounds = array<i64: 128, 128>}, {pipeline_mode = #tpu.pipeline_mode<synchronous>, transform_indices = @transform_10, window_bounds = array<i64: 1, 128>}, {transform_indices = @transform_11, window_bounds = array<i64: 16, 128>}]} {
    %c0_i32 = arith.constant 0 : i32
    %0 = arith.cmpi eq, %arg1, %c0_i32 : i32
    %1 = arith.extui %0 : i1 to i32
    %c0_i32_0 = arith.constant 0 : i32
    %2 = arith.cmpi ne, %1, %c0_i32_0 : i32
    scf.if %2 {
      %c0_17 = arith.constant 0 : index
      %c0_18 = arith.constant 0 : index
      %24 = vector.load %arg8[%c0_17, %c0_18] : memref<1x128xf32, #tpu.memory_space<vmem>>, vector<1x128xf32>
      %c0_19 = arith.constant 0 : index
      %c0_20 = arith.constant 0 : index
      %25 = vector.load %arg4[%c0_19, %c0_20] : memref<16x1xf32, #tpu.memory_space<vmem>>, vector<16x1xf32>
      %c0_21 = arith.constant 0 : index
      %c0_22 = arith.constant 0 : index
      %26 = vector.load %arg7[%c0_21, %c0_22] : memref<1x128xf32, #tpu.memory_space<vmem>>, vector<1x128xf32>
      %27 = vector.broadcast %25 : vector<16x1xf32> to vector<16x128xf32>
      %28 = vector.broadcast %26 : vector<1x128xf32> to vector<16x128xf32>
      %29 = arith.mulf %27, %28 : vector<16x128xf32>
      %30 = vector.broadcast %24 : vector<1x128xf32> to vector<16x128xf32>
      %31 = arith.addf %30, %29 : vector<16x128xf32>
      %c0_23 = arith.constant 0 : index
      %c0_24 = arith.constant 0 : index
      %32 = vector.load %arg14[%c0_23, %c0_24] : memref<16x128xf32, #tpu.memory_space<vmem>>, vector<16x128xf32>
      tpu.vector_store %arg14[%c0_23, %c0_24], %31 {strides = array<i32>} : memref<16x128xf32, #tpu.memory_space<vmem>>, vector<16x128xf32>,
    } else {
    }
    %c0 = arith.constant 0 : index
    %c0_1 = arith.constant 0 : index
    %3 = vector.load %arg2[%c0, %c0_1] : memref<16x1024xf32, #tpu.memory_space<vmem>>, vector<16x1024xf32>
    %4 = arith.truncf %3 : vector<16x1024xf32> to vector<16x1024xbf16>
    %c0_2 = arith.constant 0 : index
    %c0_3 = arith.constant 0 : index
    %5 = vector.load %arg3[%c0_2, %c0_3] : memref<16x1024xf32, #tpu.memory_space<vmem>>, vector<16x1024xf32>
    %6 = arith.truncf %5 : vector<16x1024xf32> to vector<16x1024xbf16>
    %c1024_i32 = arith.constant 1024 : i32
    %7 = arith.muli %arg1, %c1024_i32 : i32
    %8 = tpu.assume_multiple %7, 128 : i32
    %9 = arith.index_cast %8 : i32 to index
    %c0_4 = arith.constant 0 : index
    %10 = vector.load %arg5[%9, %c0_4] : memref<1024x128xbf16, #tpu.memory_space<vmem>>, vector<1024x128xbf16>
    %11 = arith.index_cast %8 : i32 to index
    %c0_5 = arith.constant 0 : index
    %12 = vector.load %arg6[%11, %c0_5] : memref<1024x128xbf16, #tpu.memory_space<vmem>>, vector<1024x128xbf16>
    %c0_6 = arith.constant 0 : index
    %c0_7 = arith.constant 0 : index
    %13 = vector.load %arg14[%c0_6, %c0_7] : memref<16x128xf32, #tpu.memory_space<vmem>>, vector<16x128xf32>
    %cst = arith.constant dense<0.000000e+00> : vector<16x128xf32>
    %14 = tpu.matmul %4, %10, %cst {dimension_numbers = #tpu.dot_dimension_numbers<[1], [0], [0], [1], [0, 0, 1, 1], [], []>} : vector<16x1024xbf16>, vector<1024x128xbf16>, vector<16x128xf32> -> vector<16x128xf32>
    %15 = arith.addf %13, %14 : vector<16x128xf32>
    %c0_8 = arith.constant 0 : index
    %c0_9 = arith.constant 0 : index
    %16 = vector.load %arg14[%c0_8, %c0_9] : memref<16x128xf32, #tpu.memory_space<vmem>>, vector<16x128xf32>
    tpu.vector_store %arg14[%c0_8, %c0_9], %15 {strides = array<i32>} : memref<16x128xf32, #tpu.memory_space<vmem>>, vector<16x128xf32>,
    %c0_10 = arith.constant 0 : index
    %c0_11 = arith.constant 0 : index
    %17 = vector.load %arg14[%c0_10, %c0_11] : memref<16x128xf32, #tpu.memory_space<vmem>>, vector<16x128xf32>
    %cst_12 = arith.constant dense<0.000000e+00> : vector<16x128xf32>
    %18 = tpu.matmul %6, %12, %cst_12 {dimension_numbers = #tpu.dot_dimension_numbers<[1], [0], [0], [1], [0, 0, 1, 1], [], []>} : vector<16x1024xbf16>, vector<1024x128xbf16>, vector<16x128xf32> -> vector<16x128xf32>
    %19 = arith.addf %17, %18 : vector<16x128xf32>
    %c0_13 = arith.constant 0 : index
    %c0_14 = arith.constant 0 : index
    %20 = vector.load %arg14[%c0_13, %c0_14] : memref<16x128xf32, #tpu.memory_space<vmem>>, vector<16x128xf32>
    tpu.vector_store %arg14[%c0_13, %c0_14], %19 {strides = array<i32>} : memref<16x128xf32, #tpu.memory_space<vmem>>, vector<16x128xf32>,
    %c0_i32_15 = arith.constant 0 : i32
    %21 = arith.cmpi eq, %arg1, %c0_i32_15 : i32
    %22 = arith.extui %21 : i1 to i32
    %c0_i32_16 = arith.constant 0 : i32
    %23 = arith.cmpi ne, %22, %c0_i32_16 : i32
    scf.if %23 {
      %c0_17 = arith.constant 0 : index
      %c0_18 = arith.constant 0 : index
      %24 = vector.load %arg14[%c0_17, %c0_18] : memref<16x128xf32, #tpu.memory_space<vmem>>, vector<16x128xf32>
      %cst_19 = arith.constant 0.000000e+00 : f32
      %25 = vector.broadcast %cst_19 : f32 to vector<16x128xf32>
      %26 = arith.maximumf %24, %25 : vector<16x128xf32>
      %27 = arith.truncf %26 : vector<16x128xf32> to vector<16x128xbf16>
      %c0_20 = arith.constant 0 : index
      %c0_21 = arith.constant 0 : index
      %28 = vector.load %arg9[%c0_20, %c0_21] : memref<128x128xbf16, #tpu.memory_space<vmem>>, vector<128x128xbf16>
      %cst_22 = arith.constant dense<0.000000e+00> : vector<16x128xf32>
      %29 = tpu.matmul %27, %28, %cst_22 {dimension_numbers = #tpu.dot_dimension_numbers<[1], [0], [0], [1], [0, 0, 1, 1], [], []>} : vector<16x128xbf16>, vector<128x128xbf16>, vector<16x128xf32> -> vector<16x128xf32>
      %c0_23 = arith.constant 0 : index
      %c0_24 = arith.constant 0 : index
      %30 = vector.load %arg10[%c0_23, %c0_24] : memref<1x128xf32, #tpu.memory_space<vmem>>, vector<1x128xf32>
      %31 = vector.broadcast %30 : vector<1x128xf32> to vector<16x128xf32>
      %32 = arith.addf %29, %31 : vector<16x128xf32>
      %cst_25 = arith.constant 0.000000e+00 : f32
      %33 = vector.broadcast %cst_25 : f32 to vector<16x128xf32>
      %34 = arith.maximumf %32, %33 : vector<16x128xf32>
      %35 = arith.truncf %34 : vector<16x128xf32> to vector<16x128xbf16>
      %c0_26 = arith.constant 0 : index
      %c0_27 = arith.constant 0 : index
      %36 = vector.load %arg11[%c0_26, %c0_27] : memref<128x128xbf16, #tpu.memory_space<vmem>>, vector<128x128xbf16>
      %cst_28 = arith.constant dense<0.000000e+00> : vector<16x128xf32>
      %37 = tpu.matmul %35, %36, %cst_28 {dimension_numbers = #tpu.dot_dimension_numbers<[1], [0], [0], [1], [0, 0, 1, 1], [], []>} : vector<16x128xbf16>, vector<128x128xbf16>, vector<16x128xf32> -> vector<16x128xf32>
      %c0_29 = arith.constant 0 : index
      %c0_30 = arith.constant 0 : index
      %38 = vector.load %arg12[%c0_29, %c0_30] : memref<1x128xf32, #tpu.memory_space<vmem>>, vector<1x128xf32>
      %39 = vector.broadcast %38 : vector<1x128xf32> to vector<16x128xf32>
      %40 = arith.addf %37, %39 : vector<16x128xf32>
      %41 = arith.mulf %40, %40 : vector<16x128xf32>
      %cst_31 = arith.constant dense<0.000000e+00> : vector<16xf32>
      %42 = vector.multi_reduction <add>, %41, %cst_31 [1] : vector<16x128xf32> to vector<16xf32>
      %43 = vector.shape_cast %42 : vector<16xf32> to vector<16x1xf32>
      %cst_32 = arith.constant 1.000000e-24 : f32
      %44 = vector.broadcast %cst_32 : f32 to vector<16x1xf32>
      %45 = arith.maximumf %43, %44 : vector<16x1xf32>
      %46 = math.rsqrt %45 : vector<16x1xf32>
      %47 = vector.broadcast %46 : vector<16x1xf32> to vector<16x128xf32>
      %48 = arith.mulf %40, %47 : vector<16x128xf32>
      %c0_33 = arith.constant 0 : index
      %c0_34 = arith.constant 0 : index
      %49 = vector.load %arg13[%c0_33, %c0_34] : memref<16x128xf32, #tpu.memory_space<vmem>>, vector<16x128xf32>
      tpu.vector_store %arg13[%c0_33, %c0_34], %48 {strides = array<i32>} : memref<16x128xf32, #tpu.memory_space<vmem>>, vector<16x128xf32>,
    } else {
    }
    return
  }
  func.func @transform_0(%arg0: i32, %arg1: i32) -> (i32, i32) {
    %c0_i32 = arith.constant 0 : i32
    return %arg0, %arg1 : i32, i32
  }
  func.func @transform_1(%arg0: i32, %arg1: i32) -> (i32, i32) {
    %c0_i32 = arith.constant 0 : i32
    return %arg0, %arg1 : i32, i32
  }
  func.func @transform_2(%arg0: i32, %arg1: i32) -> (i32, i32) {
    %c0_i32 = arith.constant 0 : i32
    %c0_i32_0 = arith.constant 0 : i32
    return %arg0, %c0_i32 : i32, i32
  }
  func.func @transform_3(%arg0: i32, %arg1: i32) -> (i32, i32) {
    %c0_i32 = arith.constant 0 : i32
    %c0_i32_0 = arith.constant 0 : i32
    %c0_i32_1 = arith.constant 0 : i32
    return %c0_i32, %c0_i32_0 : i32, i32
  }
  func.func @transform_4(%arg0: i32, %arg1: i32) -> (i32, i32) {
    %c0_i32 = arith.constant 0 : i32
    %c0_i32_0 = arith.constant 0 : i32
    %c0_i32_1 = arith.constant 0 : i32
    return %c0_i32, %c0_i32_0 : i32, i32
  }
  func.func @transform_5(%arg0: i32, %arg1: i32) -> (i32, i32) {
    %c0_i32 = arith.constant 0 : i32
    %c0_i32_0 = arith.constant 0 : i32
    %c0_i32_1 = arith.constant 0 : i32
    return %c0_i32, %c0_i32_0 : i32, i32
  }
  func.func @transform_6(%arg0: i32, %arg1: i32) -> (i32, i32) {
    %c0_i32 = arith.constant 0 : i32
    %c0_i32_0 = arith.constant 0 : i32
    %c0_i32_1 = arith.constant 0 : i32
    return %c0_i32, %c0_i32_0 : i32, i32
  }
  func.func @transform_7(%arg0: i32, %arg1: i32) -> (i32, i32) {
    %c0_i32 = arith.constant 0 : i32
    %c0_i32_0 = arith.constant 0 : i32
    %c0_i32_1 = arith.constant 0 : i32
    return %c0_i32, %c0_i32_0 : i32, i32
  }
  func.func @transform_8(%arg0: i32, %arg1: i32) -> (i32, i32) {
    %c0_i32 = arith.constant 0 : i32
    %c0_i32_0 = arith.constant 0 : i32
    %c0_i32_1 = arith.constant 0 : i32
    return %c0_i32, %c0_i32_0 : i32, i32
  }
  func.func @transform_9(%arg0: i32, %arg1: i32) -> (i32, i32) {
    %c0_i32 = arith.constant 0 : i32
    %c0_i32_0 = arith.constant 0 : i32
    %c0_i32_1 = arith.constant 0 : i32
    return %c0_i32, %c0_i32_0 : i32, i32
  }
  func.func @transform_10(%arg0: i32, %arg1: i32) -> (i32, i32) {
    %c0_i32 = arith.constant 0 : i32
    %c0_i32_0 = arith.constant 0 : i32
    %c0_i32_1 = arith.constant 0 : i32
    return %c0_i32, %c0_i32_0 : i32, i32
  }
  func.func @transform_11(%arg0: i32, %arg1: i32) -> (i32, i32) {
    %c0_i32 = arith.constant 0 : i32
    %c0_i32_0 = arith.constant 0 : i32
    return %arg0, %c0_i32 : i32, i32
  }
}

</mosaic_0001>

<llo_original>
// kernel: tpu_custom_call.1
$region0: #{tpu_custom_call.1}
  #allocation0 [shape = 'u32[]', space=smem, size = 0x4, offset = 0x4, fixed_abs, tag = 'smem constant byte address 0x4 - core index']
  #allocation1 [shape = 'u32[72,128]{1,0:T(1,128)}', space=vmem, size = 0x9000, scoped, tag = 'internal scratch']
  #allocation2 [shape = 'f32[16,128]{1,0:T(8,128)}', space=vmem, size = 0x2000, scoped, tag = 'scratch operand']
  %s0 = inlined_call_operand.hbm [shape: f32[16,1024], index: 0, kind: input, shape index: {}]
  %s1 = inlined_call_operand.hbm [shape: f32[16,1024], index: 1, kind: input, shape index: {}]
  %s2 = inlined_call_operand.vmem [shape: f32[16,1], index: 2, kind: input, shape index: {}]
  %s3 = inlined_call_operand.hbm [shape: bf16[1024,128], index: 3, kind: input, shape index: {}]
  %s4 = inlined_call_operand.hbm [shape: bf16[1024,128], index: 4, kind: input, shape index: {}]
  %s5 = inlined_call_operand.vmem [shape: f32[1,128], index: 5, kind: input, shape index: {}]
  %s6 = inlined_call_operand.vmem [shape: f32[1,128], index: 6, kind: input, shape index: {}]
  %s7 = inlined_call_operand.hbm [shape: bf16[128,128], index: 7, kind: input, shape index: {}]
  %s8 = inlined_call_operand.vmem [shape: f32[1,128], index: 8, kind: input, shape index: {}]
  %s9 = inlined_call_operand.hbm [shape: bf16[128,128], index: 9, kind: input, shape index: {}]
  %s10 = inlined_call_operand.vmem [shape: f32[1,128], index: 10, kind: input, shape index: {}]
  %s11 = inlined_call_operand.hbm [shape: f32[16,128], index: 11, kind: output, shape index: {}]
  %s12 = sld [smem:[#allocation0]]
  $region86: #{tpu_custom_call.1} parent=0
    _
  %s14 = ssub.s32 1, %s12
  %s15 = scalar_select 0, %s14, %s12
  $region1: #{tpu_custom_call.1} parent=0
    #allocation3 [shape = 'u8[65536]{0}', space=vmem, size = 0x10000, scoped, tag = 'input window, operand 0, single buffered']
    #allocation4 [shape = 's32[1]{0}', space=sflag, size = 0x4, scoped, tag = 'scoped memory for tpu_custom_call.1']
    #allocation5 [shape = 's32[1]{0}', space=sflag, size = 0x4, scoped, tag = 'scoped memory for tpu_custom_call.1']
    #allocation6 [shape = 'u8[65536]{0}', space=vmem, size = 0x10000, scoped, tag = 'input window, operand 1, single buffered']
    #allocation7 [shape = 's32[1]{0}', space=sflag, size = 0x4, scoped, tag = 'scoped memory for tpu_custom_call.1']
    #allocation8 [shape = 'u8[262144]{0}', space=vmem, size = 0x40000, scoped, tag = 'input window, operand 3, single buffered']
    #allocation9 [shape = 'u8[262144]{0}', space=vmem, size = 0x40000, scoped, tag = 'input window, operand 4, single buffered']
    #allocation10 [shape = 's32[1]{0}', space=sflag, size = 0x4, scoped, tag = 'scoped memory for tpu_custom_call.1']
    #allocation11 [shape = 'u8[32768]{0}', space=vmem, size = 0x8000, scoped, tag = 'input window, operand 7, single buffered']
    #allocation12 [shape = 'u8[32768]{0}', space=vmem, size = 0x8000, scoped, tag = 'input window, operand 9, single buffered']
    #allocation13 [shape = 's32[1]{0}', space=sflag, size = 0x4, scoped, tag = 'scoped memory for tpu_custom_call.1']
    #allocation14 [shape = 'u8[8192]{0}', space=vmem, size = 0x2000, scoped, tag = 'output window, operand 0, single buffered']
    %16 = vsyncpa [#allocation4], 0
    %17 = vsyncpa [#allocation7], 0
    %18 = vsyncpa [#allocation10], 0
    %19 = vsyncpa [#allocation13], 0
    %20 = vsyncpa [#allocation5], 0
    // Predicated region
    $region2: #{tpu_custom_call.1} parent=1 // pred_check
      _
    $region3: #{tpu_custom_call.1} parent=1 // pred_check_branch
      %22 = sbr.rel (0) target = $region5
    $region4: #{tpu_custom_call.1} parent=1 // pred_region
      %24 = vsyncadd [#allocation4], 0
      %s25 = sshll.u32 %s0, 4
      %s26 = int_to_ptr.hbm [resolvable:$true] %s25
      %s27 = sshll.u32 [#allocation3], 4
      %s28 = int_to_ptr.vmem [resolvable:$true] %s27
      %33 = dma.hbm_to_vmem [thread:$0]  %s26, 2048, %s28, [#allocation4], 1024, 1024, 64
    $region5: #{tpu_custom_call.1} parent=1 // pred_fallthru
      _
    // Predicated region
    $region6: #{tpu_custom_call.1} parent=1 // pred_check
      _
    $region7: #{tpu_custom_call.1} parent=1 // pred_check_branch
      %35 = sbr.rel (0) target = $region9
    $region8: #{tpu_custom_call.1} parent=1 // pred_region
      %37 = vsyncadd [#allocation7], 0
      %s38 = sshll.u32 %s1, 4
      %s39 = int_to_ptr.hbm [resolvable:$true] %s38
      %s40 = sshll.u32 [#allocation6], 4
      %s41 = int_to_ptr.vmem [resolvable:$true] %s40
      %46 = dma.hbm_to_vmem [thread:$0]  %s39, 2048, %s41, [#allocation7], 1024, 1024, 64
    $region9: #{tpu_custom_call.1} parent=1 // pred_fallthru
      _
    // Predicated region
    $region10: #{tpu_custom_call.1} parent=1 // pred_check
      _
    $region11: #{tpu_custom_call.1} parent=1 // pred_check_branch
      %48 = sbr.rel (0) target = $region13
    $region12: #{tpu_custom_call.1} parent=1 // pred_region
      _
    $region13: #{tpu_custom_call.1} parent=1 // pred_fallthru
      _
    // Predicated region
    $region14: #{tpu_custom_call.1} parent=1 // pred_check
      _
    $region15: #{tpu_custom_call.1} parent=1 // pred_check_branch
      %50 = sbr.rel (0) target = $region17
    $region16: #{tpu_custom_call.1} parent=1 // pred_region
      %52 = vsyncadd [#allocation7], 0
      %s53 = sshll.u32 %s3, 4
      %s54 = int_to_ptr.hbm [resolvable:$true] %s53
      %s55 = sshll.u32 [#allocation8], 4
      %s56 = int_to_ptr.vmem [resolvable:$true] %s55
      %61 = dma.hbm_to_vmem [thread:$0]  %s54, 8192, %s56, [#allocation7], 64, 64, 4
    $region17: #{tpu_custom_call.1} parent=1 // pred_fallthru
      _
    // Predicated region
    $region18: #{tpu_custom_call.1} parent=1 // pred_check
      _
    $region19: #{tpu_custom_call.1} parent=1 // pred_check_branch
      %63 = sbr.rel (0) target = $region21
    $region20: #{tpu_custom_call.1} parent=1 // pred_region
      %65 = vsyncadd [#allocation10], 0
      %s66 = sshll.u32 %s4, 4
      %s67 = int_to_ptr.hbm [resolvable:$true] %s66
      %s68 = sshll.u32 [#allocation9], 4
      %s69 = int_to_ptr.vmem [resolvable:$true] %s68
      %74 = dma.hbm_to_vmem [thread:$0]  %s67, 8192, %s69, [#allocation10], 64, 64, 4
    $region21: #{tpu_custom_call.1} parent=1 // pred_fallthru
      _
    // Predicated region
    $region22: #{tpu_custom_call.1} parent=1 // pred_check
      _
    $region23: #{tpu_custom_call.1} parent=1 // pred_check_branch
      %76 = sbr.rel (0) target = $region25
    $region24: #{tpu_custom_call.1} parent=1 // pred_region
      _
    $region25: #{tpu_custom_call.1} parent=1 // pred_fallthru
      _
    // Predicated region
    $region26: #{tpu_custom_call.1} parent=1 // pred_check
      _
    $region27: #{tpu_custom_call.1} parent=1 // pred_check_branch
      %78 = sbr.rel (0) target = $region29
    $region28: #{tpu_custom_call.1} parent=1 // pred_region
      _
    $region29: #{tpu_custom_call.1} parent=1 // pred_fallthru
      _
    // Predicated region
    $region30: #{tpu_custom_call.1} parent=1 // pred_check
      _
    $region31: #{tpu_custom_call.1} parent=1 // pred_check_branch
      %80 = sbr.rel (0) target = $region33
    $region32: #{tpu_custom_call.1} parent=1 // pred_region
      %82 = vsyncadd [#allocation10], 0
      %s83 = sshll.u32 %s7, 4
      %s84 = int_to_ptr.hbm [resolvable:$true] %s83
      %s85 = sshll.u32 [#allocation11], 4
      %s86 = int_to_ptr.vmem [resolvable:$true] %s85
      %91 = dma.hbm_to_vmem [thread:$0]  %s84, 1024, %s86, [#allocation10], 64, 64, 4
    $region33: #{tpu_custom_call.1} parent=1 // pred_fallthru
      _
    // Predicated region
    $region34: #{tpu_custom_call.1} parent=1 // pred_check
      _
    $region35: #{tpu_custom_call.1} parent=1 // pred_check_branch
      %93 = sbr.rel (0) target = $region37
    $region36: #{tpu_custom_call.1} parent=1 // pred_region
      _
    $region37: #{tpu_custom_call.1} parent=1 // pred_fallthru
      _
    // Predicated region
    $region38: #{tpu_custom_call.1} parent=1 // pred_check
      _
    $region39: #{tpu_custom_call.1} parent=1 // pred_check_branch
      %95 = sbr.rel (0) target = $region41
    $region40: #{tpu_custom_call.1} parent=1 // pred_region
      %97 = vsyncadd [#allocation13], 0
      %s98 = sshll.u32 %s9, 4
      %s99 = int_to_ptr.hbm [resolvable:$true] %s98
      %s100 = sshll.u32 [#allocation12], 4
      %s101 = int_to_ptr.vmem [resolvable:$true] %s100
      %106 = dma.hbm_to_vmem [thread:$0]  %s99, 1024, %s101, [#allocation13], 64, 64, 4
    $region41: #{tpu_custom_call.1} parent=1 // pred_fallthru
      _
    // Predicated region
    $region42: #{tpu_custom_call.1} parent=1 // pred_check
      _
    $region43: #{tpu_custom_call.1} parent=1 // pred_check_branch
      %108 = sbr.rel (0) target = $region45
    $region44: #{tpu_custom_call.1} parent=1 // pred_region
      _
    $region45: #{tpu_custom_call.1} parent=1 // pred_fallthru
      _
    // Predicated region
    $region46: #{tpu_custom_call.1} parent=1 // pred_check
      _
    $region47: #{tpu_custom_call.1} parent=1 // pred_check_branch
      %110 = sbr.rel (0) target = $region49
    $region48: #{tpu_custom_call.1} parent=1 // pred_region
      %112 = dma.done [#allocation4], 2048
    $region49: #{tpu_custom_call.1} parent=1 // pred_fallthru
      _
    // Predicated region
    $region50: #{tpu_custom_call.1} parent=1 // pred_check
      _
    $region51: #{tpu_custom_call.1} parent=1 // pred_check_branch
      %114 = sbr.rel (0) target = $region53
    $region52: #{tpu_custom_call.1} parent=1 // pred_region
      %116 = dma.done [#allocation7], 2048
    $region53: #{tpu_custom_call.1} parent=1 // pred_fallthru
      _
    // Predicated region
    $region54: #{tpu_custom_call.1} parent=1 // pred_check
      _
    $region55: #{tpu_custom_call.1} parent=1 // pred_check_branch
      %118 = sbr.rel (0) target = $region57
    $region56: #{tpu_custom_call.1} parent=1 // pred_region
      %120 = dma.done [#allocation7], 8192
    $region57: #{tpu_custom_call.1} parent=1 // pred_fallthru
      _
    // Predicated region
    $region58: #{tpu_custom_call.1} parent=1 // pred_check
      _
    $region59: #{tpu_custom_call.1} parent=1 // pred_check_branch
      %122 = sbr.rel (0) target = $region61
    $region60: #{tpu_custom_call.1} parent=1 // pred_region
      %124 = dma.done [#allocation10], 8192
    $region61: #{tpu_custom_call.1} parent=1 // pred_fallthru
      _
    // Predicated region
    $region62: #{tpu_custom_call.1} parent=1 // pred_check
      _
    $region63: #{tpu_custom_call.1} parent=1 // pred_check_branch
      %126 = sbr.rel (0) target = $region65
    $region64: #{tpu_custom_call.1} parent=1 // pred_region
      %128 = dma.done [#allocation10], 1024
    $region65: #{tpu_custom_call.1} parent=1 // pred_fallthru
      _
    // Predicated region
    $region66: #{tpu_custom_call.1} parent=1 // pred_check
      _
    $region67: #{tpu_custom_call.1} parent=1 // pred_check_branch
      %130 = sbr.rel (0) target = $region69
    $region68: #{tpu_custom_call.1} parent=1 // pred_region
      %132 = dma.done [#allocation13], 1024
    $region69: #{tpu_custom_call.1} parent=1 // pred_fallthru
      _
    %p133 = scmp.eq.s32.totalorder 0, 0
    // Predicated region
    $region70: #{tpu_custom_call.1} parent=1 // pred_check
      %p134 = pneg %p133
    $region71: #{tpu_custom_call.1} parent=1 // pred_check_branch
      %136 = sbr.rel (%p134) target = $region73
    $region72: #{tpu_custom_call.1} parent=1 // pred_region
      %v137 = vld [vmem:[%s6] sm:$0x1]
      %v138 = vld [vmem:[%s2] sm:$0xff]
      %v139 = vld [vmem:[%s2 + $0x8] sm:$0xff]
      %v140 = vld [vmem:[%s5] sm:$0x1]
      %142 = vset.pattern.permute.xlu0 0
      %143 = vperm.xlu0 %142, %v138
      %v144 = vpop.permute.xlu0 %143
      %147 = vset.pattern.permute.xlu0 0
      %148 = vperm.xlu0 %147, %v139
      %v149 = vpop.permute.xlu0 %148
      %v152 = vperm.slane %v140, 0
      %v154 = vmul.f32 %v144, %v152
      %v155 = vmul.f32 %v149, %v152
      %v157 = vperm.slane %v137, 0
      %v159 = vadd.f32 %v157, %v154
      %v160 = vadd.f32 %v157, %v155
      %161 = vst [vmem:[#allocation2] sm:$0xff] %v159
      %162 = vst [vmem:[#allocation2 + $0x8] sm:$0xff] %v160
    $region73: #{tpu_custom_call.1} parent=1 // pred_fallthru
      _
    %v163 = vld [vmem:[#allocation3] sm:$0xff]
    %v164 = vld [vmem:[#allocation3 + $0x8] sm:$0xff]
    %v165 = vld [vmem:[#allocation3 + $0x10] sm:$0xff]
    %v166 = vld [vmem:[#allocation3 + $0x18] sm:$0xff]
    %v167 = vld [vmem:[#allocation3 + $0x20] sm:$0xff]
    %v168 = vld [vmem:[#allocation3 + $0x28] sm:$0xff]
    %v169 = vld [vmem:[#allocation3 + $0x30] sm:$0xff]
    %v170 = vld [vmem:[#allocation3 + $0x38] sm:$0xff]
    %v171 = vld [vmem:[#allocation3 + $0x40] sm:$0xff]
    %v172 = vld [vmem:[#allocation3 + $0x48] sm:$0xff]
    %v173 = vld [vmem:[#allocation3 + $0x50] sm:$0xff]
    %v174 = vld [vmem:[#allocation3 + $0x58] sm:$0xff]
    %v175 = vld [vmem:[#allocation3 + $0x60] sm:$0xff]
    %v176 = vld [vmem:[#allocation3 + $0x68] sm:$0xff]
    %v177 = vld [vmem:[#allocation3 + $0x70] sm:$0xff]
    %v178 = vld [vmem:[#allocation3 + $0x78] sm:$0xff]
    %v179 = vpack.c.bf16 %v171, %v163
    %v180 = vpack.c.bf16 %v172, %v164
    %v181 = vpack.c.bf16 %v173, %v165
    %v182 = vpack.c.bf16 %v174, %v166
    %v183 = vpack.c.bf16 %v175, %v167
    %v184 = vpack.c.bf16 %v176, %v168
    %v185 = vpack.c.bf16 %v177, %v169
    %v186 = vpack.c.bf16 %v178, %v170
    %v187 = vld [vmem:[#allocation6] sm:$0xff]
    %v188 = vld [vmem:[#allocation6 + $0x8] sm:$0xff]
    %v189 = vld [vmem:[#allocation6 + $0x10] sm:$0xff]
    %v190 = vld [vmem:[#allocation6 + $0x18] sm:$0xff]
    %v191 = vld [vmem:[#allocation6 + $0x20] sm:$0xff]
    %v192 = vld [vmem:[#allocation6 + $0x28] sm:$0xff]
    %v193 = vld [vmem:[#allocation6 + $0x30] sm:$0xff]
    %v194 = vld [vmem:[#allocation6 + $0x38] sm:$0xff]
    %v195 = vld [vmem:[#allocation6 + $0x40] sm:$0xff]
    %v196 = vld [vmem:[#allocation6 + $0x48] sm:$0xff]
    %v197 = vld [vmem:[#allocation6 + $0x50] sm:$0xff]
    %v198 = vld [vmem:[#allocation6 + $0x58] sm:$0xff]
    %v199 = vld [vmem:[#allocation6 + $0x60] sm:$0xff]
    %v200 = vld [vmem:[#allocation6 + $0x68] sm:$0xff]
    %v201 = vld [vmem:[#allocation6 + $0x70] sm:$0xff]
    %v202 = vld [vmem:[#allocation6 + $0x78] sm:$0xff]
    %v203 = vpack.c.bf16 %v195, %v187
    %v204 = vpack.c.bf16 %v196, %v188
    %v205 = vpack.c.bf16 %v197, %v189
    %v206 = vpack.c.bf16 %v198, %v190
    %v207 = vpack.c.bf16 %v199, %v191
    %v208 = vpack.c.bf16 %v200, %v192
    %v209 = vpack.c.bf16 %v201, %v193
    %v210 = vpack.c.bf16 %v202, %v194
    %s211 = smul.u32 0, 1024
    %s212 = sshra.s32 %s211, 3
    %s213 = sand.u32 %s211, 7
    %s214 = smul.addr %s212, 4
    %s215 = scalar_lea.vmem [#allocation8], %s214
    %v216 = vld [vmem:[%s215] sm:$0xf]
    %v217 = vld [vmem:[%s215 + $0x4] sm:$0xf]
    %v218 = vld [vmem:[%s215 + $0x8] sm:$0xf]
    %v219 = vld [vmem:[%s215 + $0xc] sm:$0xf]
    %v220 = vld [vmem:[%s215 + $0x10] sm:$0xf]
    %v221 = vld [vmem:[%s215 + $0x14] sm:$0xf]
    %v222 = vld [vmem:[%s215 + $0x18] sm:$0xf]
    %v223 = vld [vmem:[%s215 + $0x1c] sm:$0xf]
    %v224 = vld [vmem:[%s215 + $0x20] sm:$0xf]
    %v225 = vld [vmem:[%s215 + $0x24] sm:$0xf]
    %v226 = vld [vmem:[%s215 + $0x28] sm:$0xf]
    %v227 = vld [vmem:[%s215 + $0x2c] sm:$0xf]
    %v228 = vld [vmem:[%s215 + $0x30] sm:$0xf]
    %v229 = vld [vmem:[%s215 + $0x34] sm:$0xf]
    %v230 = vld [vmem:[%s215 + $0x38] sm:$0xf]
    %v231 = vld [vmem:[%s215 + $0x3c] sm:$0xf]
    %v232 = vld [vmem:[%s215 + $0x40] sm:$0xf]
    %v233 = vld [vmem:[%s215 + $0x44] sm:$0xf]
    %v234 = vld [vmem:[%s215 + $0x48] sm:$0xf]
    %v235 = vld [vmem:[%s215 + $0x4c] sm:$0xf]
    %v236 = vld [vmem:[%s215 + $0x50] sm:$0xf]
    %v237 = vld [vmem:[%s215 + $0x54] sm:$0xf]
    %v238 = vld [vmem:[%s215 + $0x58] sm:$0xf]
    %v239 = vld [vmem:[%s215 + $0x5c] sm:$0xf]
    %v240 = vld [vmem:[%s215 + $0x60] sm:$0xf]
    %v241 = vld [vmem:[%s215 + $0x64] sm:$0xf]
    %v242 = vld [vmem:[%s215 + $0x68] sm:$0xf]
    %v243 = vld [vmem:[%s215 + $0x6c] sm:$0xf]
    %v244 = vld [vmem:[%s215 + $0x70] sm:$0xf]
    %v245 = vld [vmem:[%s215 + $0x74] sm:$0xf]
    %v246 = vld [vmem:[%s215 + $0x78] sm:$0xf]
    %v247 = vld [vmem:[%s215 + $0x7c] sm:$0xf]
    %v248 = vld [vmem:[%s215 + $0x80] sm:$0xf]
    %v249 = vld [vmem:[%s215 + $0x84] sm:$0xf]
    %v250 = vld [vmem:[%s215 + $0x88] sm:$0xf]
    %v251 = vld [vmem:[%s215 + $0x8c] sm:$0xf]
    %v252 = vld [vmem:[%s215 + $0x90] sm:$0xf]
    %v253 = vld [vmem:[%s215 + $0x94] sm:$0xf]
    %v254 = vld [vmem:[%s215 + $0x98] sm:$0xf]
    %v255 = vld [vmem:[%s215 + $0x9c] sm:$0xf]
    %v256 = vld [vmem:[%s215 + $0xa0] sm:$0xf]
    %v257 = vld [vmem:[%s215 + $0xa4] sm:$0xf]
    %v258 = vld [vmem:[%s215 + $0xa8] sm:$0xf]
    %v259 = vld [vmem:[%s215 + $0xac] sm:$0xf]
    %v260 = vld [vmem:[%s215 + $0xb0] sm:$0xf]
    %v261 = vld [vmem:[%s215 + $0xb4] sm:$0xf]
    %v262 = vld [vmem:[%s215 + $0xb8] sm:$0xf]
    %v263 = vld [vmem:[%s215 + $0xbc] sm:$0xf]
    %v264 = vld [vmem:[%s215 + $0xc0] sm:$0xf]
    %v265 = vld [vmem:[%s215 + $0xc4] sm:$0xf]
    %v266 = vld [vmem:[%s215 + $0xc8] sm:$0xf]
    %v267 = vld [vmem:[%s215 + $0xcc] sm:$0xf]
    %v268 = vld [vmem:[%s215 + $0xd0] sm:$0xf]
    %v269 = vld [vmem:[%s215 + $0xd4] sm:$0xf]
    %v270 = vld [vmem:[%s215 + $0xd8] sm:$0xf]
    %v271 = vld [vmem:[%s215 + $0xdc] sm:$0xf]
    %v272 = vld [vmem:[%s215 + $0xe0] sm:$0xf]
    %v273 = vld [vmem:[%s215 + $0xe4] sm:$0xf]
    %v274 = vld [vmem:[%s215 + $0xe8] sm:$0xf]
    %v275 = vld [vmem:[%s215 + $0xec] sm:$0xf]
    %v276 = vld [vmem:[%s215 + $0xf0] sm:$0xf]
    %v277 = vld [vmem:[%s215 + $0xf4] sm:$0xf]
    %v278 = vld [vmem:[%s215 + $0xf8] sm:$0xf]
    %v279 = vld [vmem:[%s215 + $0xfc] sm:$0xf]
    %v280 = vld [vmem:[%s215 + $0x100] sm:$0xf]
    %v281 = vld [vmem:[%s215 + $0x104] sm:$0xf]
    %v282 = vld [vmem:[%s215 + $0x108] sm:$0xf]
    %v283 = vld [vmem:[%s215 + $0x10c] sm:$0xf]
    %v284 = vld [vmem:[%s215 + $0x110] sm:$0xf]
    %v285 = vld [vmem:[%s215 + $0x114] sm:$0xf]
    %v286 = vld [vmem:[%s215 + $0x118] sm:$0xf]
    %v287 = vld [vmem:[%s215 + $0x11c] sm:$0xf]
    %v288 = vld [vmem:[%s215 + $0x120] sm:$0xf]
    %v289 = vld [vmem:[%s215 + $0x124] sm:$0xf]
    %v290 = vld [vmem:[%s215 + $0x128] sm:$0xf]
    %v291 = vld [vmem:[%s215 + $0x12c] sm:$0xf]
    %v292 = vld [vmem:[%s215 + $0x130] sm:$0xf]
    %v293 = vld [vmem:[%s215 + $0x134] sm:$0xf]
    %v294 = vld [vmem:[%s215 + $0x138] sm:$0xf]
    %v295 = vld [vmem:[%s215 + $0x13c] sm:$0xf]
    %v296 = vld [vmem:[%s215 + $0x140] sm:$0xf]
    %v297 = vld [vmem:[%s215 + $0x144] sm:$0xf]
    %v298 = vld [vmem:[%s215 + $0x148] sm:$0xf]
    %v299 = vld [vmem:[%s215 + $0x14c] sm:$0xf]
    %v300 = vld [vmem:[%s215 + $0x150] sm:$0xf]
    %v301 = vld [vmem:[%s215 + $0x154] sm:$0xf]
    %v302 = vld [vmem:[%s215 + $0x158] sm:$0xf]
    %v303 = vld [vmem:[%s215 + $0x15c] sm:$0xf]
    %v304 = vld [vmem:[%s215 + $0x160] sm:$0xf]
    %v305 = vld [vmem:[%s215 + $0x164] sm:$0xf]
    %v306 = vld [vmem:[%s215 + $0x168] sm:$0xf]
    %v307 = vld [vmem:[%s215 + $0x16c] sm:$0xf]
    %v308 = vld [vmem:[%s215 + $0x170] sm:$0xf]
    %v309 = vld [vmem:[%s215 + $0x174] sm:$0xf]
    %v310 = vld [vmem:[%s215 + $0x178] sm:$0xf]
    %v311 = vld [vmem:[%s215 + $0x17c] sm:$0xf]
    %v312 = vld [vmem:[%s215 + $0x180] sm:$0xf]
    %v313 = vld [vmem:[%s215 + $0x184] sm:$0xf]
    %v314 = vld [vmem:[%s215 + $0x188] sm:$0xf]
    %v315 = vld [vmem:[%s215 + $0x18c] sm:$0xf]
    %v316 = vld [vmem:[%s215 + $0x190] sm:$0xf]
    %v317 = vld [vmem:[%s215 + $0x194] sm:$0xf]
    %v318 = vld [vmem:[%s215 + $0x198] sm:$0xf]
    %v319 = vld [vmem:[%s215 + $0x19c] sm:$0xf]
    %v320 = vld [vmem:[%s215 + $0x1a0] sm:$0xf]
    %v321 = vld [vmem:[%s215 + $0x1a4] sm:$0xf]
    %v322 = vld [vmem:[%s215 + $0x1a8] sm:$0xf]
    %v323 = vld [vmem:[%s215 + $0x1ac] sm:$0xf]
    %v324 = vld [vmem:[%s215 + $0x1b0] sm:$0xf]
    %v325 = vld [vmem:[%s215 + $0x1b4] sm:$0xf]
    %v326 = vld [vmem:[%s215 + $0x1b8] sm:$0xf]
    %v327 = vld [vmem:[%s215 + $0x1bc] sm:$0xf]
    %v328 = vld [vmem:[%s215 + $0x1c0] sm:$0xf]
    %v329 = vld [vmem:[%s215 + $0x1c4] sm:$0xf]
    %v330 = vld [vmem:[%s215 + $0x1c8] sm:$0xf]
    %v331 = vld [vmem:[%s215 + $0x1cc] sm:$0xf]
    %v332 = vld [vmem:[%s215 + $0x1d0] sm:$0xf]
    %v333 = vld [vmem:[%s215 + $0x1d4] sm:$0xf]
    %v334 = vld [vmem:[%s215 + $0x1d8] sm:$0xf]
    %v335 = vld [vmem:[%s215 + $0x1dc] sm:$0xf]
    %v336 = vld [vmem:[%s215 + $0x1e0] sm:$0xf]
    %v337 = vld [vmem:[%s215 + $0x1e4] sm:$0xf]
    %v338 = vld [vmem:[%s215 + $0x1e8] sm:$0xf]
    %v339 = vld [vmem:[%s215 + $0x1ec] sm:$0xf]
    %v340 = vld [vmem:[%s215 + $0x1f0] sm:$0xf]
    %v341 = vld [vmem:[%s215 + $0x1f4] sm:$0xf]
    %v342 = vld [vmem:[%s215 + $0x1f8] sm:$0xf]
    %v343 = vld [vmem:[%s215 + $0x1fc] sm:$0xf]
    %s344 = smul.addr %s212, 4
    %s345 = scalar_lea.vmem [#allocation9], %s344
    %v346 = vld [vmem:[%s345] sm:$0xf]
    %v347 = vld [vmem:[%s345 + $0x4] sm:$0xf]
    %v348 = vld [vmem:[%s345 + $0x8] sm:$0xf]
    %v349 = vld [vmem:[%s345 + $0xc] sm:$0xf]
    %v350 = vld [vmem:[%s345 + $0x10] sm:$0xf]
    %v351 = vld [vmem:[%s345 + $0x14] sm:$0xf]
    %v352 = vld [vmem:[%s345 + $0x18] sm:$0xf]
    %v353 = vld [vmem:[%s345 + $0x1c] sm:$0xf]
    %v354 = vld [vmem:[%s345 + $0x20] sm:$0xf]
    %v355 = vld [vmem:[%s345 + $0x24] sm:$0xf]
    %v356 = vld [vmem:[%s345 + $0x28] sm:$0xf]
    %v357 = vld [vmem:[%s345 + $0x2c] sm:$0xf]
    %v358 = vld [vmem:[%s345 + $0x30] sm:$0xf]
    %v359 = vld [vmem:[%s345 + $0x34] sm:$0xf]
    %v360 = vld [vmem:[%s345 + $0x38] sm:$0xf]
    %v361 = vld [vmem:[%s345 + $0x3c] sm:$0xf]
    %v362 = vld [vmem:[%s345 + $0x40] sm:$0xf]
    %v363 = vld [vmem:[%s345 + $0x44] sm:$0xf]
    %v364 = vld [vmem:[%s345 + $0x48] sm:$0xf]
    %v365 = vld [vmem:[%s345 + $0x4c] sm:$0xf]
    %v366 = vld [vmem:[%s345 + $0x50] sm:$0xf]
    %v367 = vld [vmem:[%s345 + $0x54] sm:$0xf]
    %v368 = vld [vmem:[%s345 + $0x58] sm:$0xf]
    %v369 = vld [vmem:[%s345 + $0x5c] sm:$0xf]
    %v370 = vld [vmem:[%s345 + $0x60] sm:$0xf]
    %v371 = vld [vmem:[%s345 + $0x64] sm:$0xf]
    %v372 = vld [vmem:[%s345 + $0x68] sm:$0xf]
    %v373 = vld [vmem:[%s345 + $0x6c] sm:$0xf]
    %v374 = vld [vmem:[%s345 + $0x70] sm:$0xf]
    %v375 = vld [vmem:[%s345 + $0x74] sm:$0xf]
    %v376 = vld [vmem:[%s345 + $0x78] sm:$0xf]
    %v377 = vld [vmem:[%s345 + $0x7c] sm:$0xf]
    %v378 = vld [vmem:[%s345 + $0x80] sm:$0xf]
    %v379 = vld [vmem:[%s345 + $0x84] sm:$0xf]
    %v380 = vld [vmem:[%s345 + $0x88] sm:$0xf]
    %v381 = vld [vmem:[%s345 + $0x8c] sm:$0xf]
    %v382 = vld [vmem:[%s345 + $0x90] sm:$0xf]
    %v383 = vld [vmem:[%s345 + $0x94] sm:$0xf]
    %v384 = vld [vmem:[%s345 + $0x98] sm:$0xf]
    %v385 = vld [vmem:[%s345 + $0x9c] sm:$0xf]
    %v386 = vld [vmem:[%s345 + $0xa0] sm:$0xf]
    %v387 = vld [vmem:[%s345 + $0xa4] sm:$0xf]
    %v388 = vld [vmem:[%s345 + $0xa8] sm:$0xf]
    %v389 = vld [vmem:[%s345 + $0xac] sm:$0xf]
    %v390 = vld [vmem:[%s345 + $0xb0] sm:$0xf]
    %v391 = vld [vmem:[%s345 + $0xb4] sm:$0xf]
    %v392 = vld [vmem:[%s345 + $0xb8] sm:$0xf]
    %v393 = vld [vmem:[%s345 + $0xbc] sm:$0xf]
    %v394 = vld [vmem:[%s345 + $0xc0] sm:$0xf]
    %v395 = vld [vmem:[%s345 + $0xc4] sm:$0xf]
    %v396 = vld [vmem:[%s345 + $0xc8] sm:$0xf]
    %v397 = vld [vmem:[%s345 + $0xcc] sm:$0xf]
    %v398 = vld [vmem:[%s345 + $0xd0] sm:$0xf]
    %v399 = vld [vmem:[%s345 + $0xd4] sm:$0xf]
    %v400 = vld [vmem:[%s345 + $0xd8] sm:$0xf]
    %v401 = vld [vmem:[%s345 + $0xdc] sm:$0xf]
    %v402 = vld [vmem:[%s345 + $0xe0] sm:$0xf]
    %v403 = vld [vmem:[%s345 + $0xe4] sm:$0xf]
    %v404 = vld [vmem:[%s345 + $0xe8] sm:$0xf]
    %v405 = vld [vmem:[%s345 + $0xec] sm:$0xf]
    %v406 = vld [vmem:[%s345 + $0xf0] sm:$0xf]
    %v407 = vld [vmem:[%s345 + $0xf4] sm:$0xf]
    %v408 = vld [vmem:[%s345 + $0xf8] sm:$0xf]
    %v409 = vld [vmem:[%s345 + $0xfc] sm:$0xf]
    %v410 = vld [vmem:[%s345 + $0x100] sm:$0xf]
    %v411 = vld [vmem:[%s345 + $0x104] sm:$0xf]
    %v412 = vld [vmem:[%s345 + $0x108] sm:$0xf]
    %v413 = vld [vmem:[%s345 + $0x10c] sm:$0xf]
    %v414 = vld [vmem:[%s345 + $0x110] sm:$0xf]
    %v415 = vld [vmem:[%s345 + $0x114] sm:$0xf]
    %v416 = vld [vmem:[%s345 + $0x118] sm:$0xf]
    %v417 = vld [vmem:[%s345 + $0x11c] sm:$0xf]
    %v418 = vld [vmem:[%s345 + $0x120] sm:$0xf]
    %v419 = vld [vmem:[%s345 + $0x124] sm:$0xf]
    %v420 = vld [vmem:[%s345 + $0x128] sm:$0xf]
    %v421 = vld [vmem:[%s345 + $0x12c] sm:$0xf]
    %v422 = vld [vmem:[%s345 + $0x130] sm:$0xf]
    %v423 = vld [vmem:[%s345 + $0x134] sm:$0xf]
    %v424 = vld [vmem:[%s345 + $0x138] sm:$0xf]
    %v425 = vld [vmem:[%s345 + $0x13c] sm:$0xf]
    %v426 = vld [vmem:[%s345 + $0x140] sm:$0xf]
    %v427 = vld [vmem:[%s345 + $0x144] sm:$0xf]
    %v428 = vld [vmem:[%s345 + $0x148] sm:$0xf]
    %v429 = vld [vmem:[%s345 + $0x14c] sm:$0xf]
    %v430 = vld [vmem:[%s345 + $0x150] sm:$0xf]
    %v431 = vld [vmem:[%s345 + $0x154] sm:$0xf]
    %v432 = vld [vmem:[%s345 + $0x158] sm:$0xf]
    %v433 = vld [vmem:[%s345 + $0x15c] sm:$0xf]
    %v434 = vld [vmem:[%s345 + $0x160] sm:$0xf]
    %v435 = vld [vmem:[%s345 + $0x164] sm:$0xf]
    %v436 = vld [vmem:[%s345 + $0x168] sm:$0xf]
    %v437 = vld [vmem:[%s345 + $0x16c] sm:$0xf]
    %v438 = vld [vmem:[%s345 + $0x170] sm:$0xf]
    %v439 = vld [vmem:[%s345 + $0x174] sm:$0xf]
    %v440 = vld [vmem:[%s345 + $0x178] sm:$0xf]
    %v441 = vld [vmem:[%s345 + $0x17c] sm:$0xf]
    %v442 = vld [vmem:[%s345 + $0x180] sm:$0xf]
    %v443 = vld [vmem:[%s345 + $0x184] sm:$0xf]
    %v444 = vld [vmem:[%s345 + $0x188] sm:$0xf]
    %v445 = vld [vmem:[%s345 + $0x18c] sm:$0xf]
    %v446 = vld [vmem:[%s345 + $0x190] sm:$0xf]
    %v447 = vld [vmem:[%s345 + $0x194] sm:$0xf]
    %v448 = vld [vmem:[%s345 + $0x198] sm:$0xf]
    %v449 = vld [vmem:[%s345 + $0x19c] sm:$0xf]
    %v450 = vld [vmem:[%s345 + $0x1a0] sm:$0xf]
    %v451 = vld [vmem:[%s345 + $0x1a4] sm:$0xf]
    %v452 = vld [vmem:[%s345 + $0x1a8] sm:$0xf]
    %v453 = vld [vmem:[%s345 + $0x1ac] sm:$0xf]
    %v454 = vld [vmem:[%s345 + $0x1b0] sm:$0xf]
    %v455 = vld [vmem:[%s345 + $0x1b4] sm:$0xf]
    %v456 = vld [vmem:[%s345 + $0x1b8] sm:$0xf]
    %v457 = vld [vmem:[%s345 + $0x1bc] sm:$0xf]
    %v458 = vld [vmem:[%s345 + $0x1c0] sm:$0xf]
    %v459 = vld [vmem:[%s345 + $0x1c4] sm:$0xf]
    %v460 = vld [vmem:[%s345 + $0x1c8] sm:$0xf]
    %v461 = vld [vmem:[%s345 + $0x1cc] sm:$0xf]
    %v462 = vld [vmem:[%s345 + $0x1d0] sm:$0xf]
    %v463 = vld [vmem:[%s345 + $0x1d4] sm:$0xf]
    %v464 = vld [vmem:[%s345 + $0x1d8] sm:$0xf]
    %v465 = vld [vmem:[%s345 + $0x1dc] sm:$0xf]
    %v466 = vld [vmem:[%s345 + $0x1e0] sm:$0xf]
    %v467 = vld [vmem:[%s345 + $0x1e4] sm:$0xf]
    %v468 = vld [vmem:[%s345 + $0x1e8] sm:$0xf]
    %v469 = vld [vmem:[%s345 + $0x1ec] sm:$0xf]
    %v470 = vld [vmem:[%s345 + $0x1f0] sm:$0xf]
    %v471 = vld [vmem:[%s345 + $0x1f4] sm:$0xf]
    %v472 = vld [vmem:[%s345 + $0x1f8] sm:$0xf]
    %v473 = vld [vmem:[%s345 + $0x1fc] sm:$0xf]
    %v474 = vld [vmem:[#allocation2] sm:$0xff]
    %v475 = vld [vmem:[#allocation2 + $0x8] sm:$0xff]
    %v604 = vunpack.c.l.b16 %v216
    %v605 = vunpack.c.l.b16 %v217
    %v606 = vunpack.c.l.b16 %v218
    %v607 = vunpack.c.l.b16 %v219
    %v608 = vunpack.c.l.b16 %v220
    %v609 = vunpack.c.l.b16 %v221
    %v610 = vunpack.c.l.b16 %v222
    %v611 = vunpack.c.l.b16 %v223
    %v612 = vunpack.c.l.b16 %v224
    %v613 = vunpack.c.l.b16 %v225
    %v614 = vunpack.c.l.b16 %v226
    %v615 = vunpack.c.l.b16 %v227
    %v616 = vunpack.c.l.b16 %v228
    %v617 = vunpack.c.l.b16 %v229
    %v618 = vunpack.c.l.b16 %v230
    %v619 = vunpack.c.l.b16 %v231
    %v620 = vunpack.c.l.b16 %v232
    %v621 = vunpack.c.l.b16 %v233
    %v622 = vunpack.c.l.b16 %v234
    %v623 = vunpack.c.l.b16 %v235
    %v624 = vunpack.c.l.b16 %v236
    %v625 = vunpack.c.l.b16 %v237
    %v626 = vunpack.c.l.b16 %v238
    %v627 = vunpack.c.l.b16 %v239
    %v628 = vunpack.c.l.b16 %v240
    %v629 = vunpack.c.l.b16 %v241
    %v630 = vunpack.c.l.b16 %v242
    %v631 = vunpack.c.l.b16 %v243
    %v632 = vunpack.c.l.b16 %v244
    %v633 = vunpack.c.l.b16 %v245
    %v634 = vunpack.c.l.b16 %v246
    %v635 = vunpack.c.l.b16 %v247
    %v636 = vunpack.c.l.b16 %v248
    %v637 = vunpack.c.l.b16 %v249
    %v638 = vunpack.c.l.b16 %v250
    %v639 = vunpack.c.l.b16 %v251
    %v640 = vunpack.c.l.b16 %v252
    %v641 = vunpack.c.l.b16 %v253
    %v642 = vunpack.c.l.b16 %v254
    %v643 = vunpack.c.l.b16 %v255
    %v644 = vunpack.c.l.b16 %v256
    %v645 = vunpack.c.l.b16 %v257
    %v646 = vunpack.c.l.b16 %v258
    %v647 = vunpack.c.l.b16 %v259
    %v648 = vunpack.c.l.b16 %v260
    %v649 = vunpack.c.l.b16 %v261
    %v650 = vunpack.c.l.b16 %v262
    %v651 = vunpack.c.l.b16 %v263
    %v652 = vunpack.c.l.b16 %v264
    %v653 = vunpack.c.l.b16 %v265
    %v654 = vunpack.c.l.b16 %v266
    %v655 = vunpack.c.l.b16 %v267
    %v656 = vunpack.c.l.b16 %v268
    %v657 = vunpack.c.l.b16 %v269
    %v658 = vunpack.c.l.b16 %v270
    %v659 = vunpack.c.l.b16 %v271
    %v660 = vunpack.c.l.b16 %v272
    %v661 = vunpack.c.l.b16 %v273
    %v662 = vunpack.c.l.b16 %v274
    %v663 = vunpack.c.l.b16 %v275
    %v664 = vunpack.c.l.b16 %v276
    %v665 = vunpack.c.l.b16 %v277
    %v666 = vunpack.c.l.b16 %v278
    %v667 = vunpack.c.l.b16 %v279
    %v668 = vunpack.c.l.b16 %v280
    %v669 = vunpack.c.l.b16 %v281
    %v670 = vunpack.c.l.b16 %v282
    %v671 = vunpack.c.l.b16 %v283
    %v672 = vunpack.c.l.b16 %v284
    %v673 = vunpack.c.l.b16 %v285
    %v674 = vunpack.c.l.b16 %v286
    %v675 = vunpack.c.l.b16 %v287
    %v676 = vunpack.c.l.b16 %v288
    %v677 = vunpack.c.l.b16 %v289
    %v678 = vunpack.c.l.b16 %v290
    %v679 = vunpack.c.l.b16 %v291
    %v680 = vunpack.c.l.b16 %v292
    %v681 = vunpack.c.l.b16 %v293
    %v682 = vunpack.c.l.b16 %v294
    %v683 = vunpack.c.l.b16 %v295
    %v684 = vunpack.c.l.b16 %v296
    %v685 = vunpack.c.l.b16 %v297
    %v686 = vunpack.c.l.b16 %v298
    %v687 = vunpack.c.l.b16 %v299
    %v688 = vunpack.c.l.b16 %v300
    %v689 = vunpack.c.l.b16 %v301
    %v690 = vunpack.c.l.b16 %v302
    %v691 = vunpack.c.l.b16 %v303
    %v692 = vunpack.c.l.b16 %v304
    %v693 = vunpack.c.l.b16 %v305
    %v694 = vunpack.c.l.b16 %v306
    %v695 = vunpack.c.l.b16 %v307
    %v696 = vunpack.c.l.b16 %v308
    %v697 = vunpack.c.l.b16 %v309
    %v698 = vunpack.c.l.b16 %v310
    %v699 = vunpack.c.l.b16 %v311
    %v700 = vunpack.c.l.b16 %v312
    %v701 = vunpack.c.l.b16 %v313
    %v702 = vunpack.c.l.b16 %v314
    %v703 = vunpack.c.l.b16 %v315
    %v704 = vunpack.c.l.b16 %v316
    %v705 = vunpack.c.l.b16 %v317
    %v706 = vunpack.c.l.b16 %v318
    %v707 = vunpack.c.l.b16 %v319
    %v708 = vunpack.c.l.b16 %v320
    %v709 = vunpack.c.l.b16 %v321
    %v710 = vunpack.c.l.b16 %v322
    %v711 = vunpack.c.l.b16 %v323
    %v712 = vunpack.c.l.b16 %v324
    %v713 = vunpack.c.l.b16 %v325
    %v714 = vunpack.c.l.b16 %v326
    %v715 = vunpack.c.l.b16 %v327
    %v716 = vunpack.c.l.b16 %v328
    %v717 = vunpack.c.l.b16 %v329
    %v718 = vunpack.c.l.b16 %v330
    %v719 = vunpack.c.l.b16 %v331
    %v720 = vunpack.c.l.b16 %v332
    %v721 = vunpack.c.l.b16 %v333
    %v722 = vunpack.c.l.b16 %v334
    %v723 = vunpack.c.l.b16 %v335
    %v724 = vunpack.c.l.b16 %v336
    %v725 = vunpack.c.l.b16 %v337
    %v726 = vunpack.c.l.b16 %v338
    %v727 = vunpack.c.l.b16 %v339
    %v728 = vunpack.c.l.b16 %v340
    %v729 = vunpack.c.l.b16 %v341
    %v730 = vunpack.c.l.b16 %v342
    %v731 = vunpack.c.l.b16 %v343
    %v732 = vpack.c.b16 %v605, %v604
    %v733 = vpack.c.b16 %v607, %v606
    %v734 = vpack.c.b16 %v609, %v608
    %v735 = vpack.c.b16 %v611, %v610
    %v736 = vpack.c.b16 %v613, %v612
    %v737 = vpack.c.b16 %v615, %v614
    %v738 = vpack.c.b16 %v617, %v616
    %v739 = vpack.c.b16 %v619, %v618
    %v740 = vpack.c.b16 %v621, %v620
    %v741 = vpack.c.b16 %v623, %v622
    %v742 = vpack.c.b16 %v625, %v624
    %v743 = vpack.c.b16 %v627, %v626
    %v744 = vpack.c.b16 %v629, %v628
    %v745 = vpack.c.b16 %v631, %v630
    %v746 = vpack.c.b16 %v633, %v632
    %v747 = vpack.c.b16 %v635, %v634
    %v748 = vpack.c.b16 %v637, %v636
    %v749 = vpack.c.b16 %v639, %v638
    %v750 = vpack.c.b16 %v641, %v640
    %v751 = vpack.c.b16 %v643, %v642
    %v752 = vpack.c.b16 %v645, %v644
    %v753 = vpack.c.b16 %v647, %v646
    %v754 = vpack.c.b16 %v649, %v648
    %v755 = vpack.c.b16 %v651, %v650
    %v756 = vpack.c.b16 %v653, %v652
    %v757 = vpack.c.b16 %v655, %v654
    %v758 = vpack.c.b16 %v657, %v656
    %v759 = vpack.c.b16 %v659, %v658
    %v760 = vpack.c.b16 %v661, %v660
    %v761 = vpack.c.b16 %v663, %v662
    %v762 = vpack.c.b16 %v665, %v664
    %v763 = vpack.c.b16 %v667, %v666
    %v764 = vpack.c.b16 %v669, %v668
    %v765 = vpack.c.b16 %v671, %v670
    %v766 = vpack.c.b16 %v673, %v672
    %v767 = vpack.c.b16 %v675, %v674
    %v768 = vpack.c.b16 %v677, %v676
    %v769 = vpack.c.b16 %v679, %v678
    %v770 = vpack.c.b16 %v681, %v680
    %v771 = vpack.c.b16 %v683, %v682
    %v772 = vpack.c.b16 %v685, %v684
    %v773 = vpack.c.b16 %v687, %v686
    %v774 = vpack.c.b16 %v689, %v688
    %v775 = vpack.c.b16 %v691, %v690
    %v776 = vpack.c.b16 %v693, %v692
    %v777 = vpack.c.b16 %v695, %v694
    %v778 = vpack.c.b16 %v697, %v696
    %v779 = vpack.c.b16 %v699, %v698
    %v780 = vpack.c.b16 %v701, %v700
    %v781 = vpack.c.b16 %v703, %v702
    %v782 = vpack.c.b16 %v705, %v704
    %v783 = vpack.c.b16 %v707, %v706
    %v784 = vpack.c.b16 %v709, %v708
    %v785 = vpack.c.b16 %v711, %v710
    %v786 = vpack.c.b16 %v713, %v712
    %v787 = vpack.c.b16 %v715, %v714
    %v788 = vpack.c.b16 %v717, %v716
    %v789 = vpack.c.b16 %v719, %v718
    %v790 = vpack.c.b16 %v721, %v720
    %v791 = vpack.c.b16 %v723, %v722
    %v792 = vpack.c.b16 %v725, %v724
    %v793 = vpack.c.b16 %v727, %v726
    %v794 = vpack.c.b16 %v729, %v728
    %v795 = vpack.c.b16 %v731, %v730
    %860 = vmatpush.bf16.msra.mxu0 %v739
    %861 = vmatpush.bf16.msra.mxu0 %v738
    %862 = vmatpush.bf16.msra.mxu0 %v737
    %863 = vmatpush.bf16.msra.mxu0 %v736
    %864 = vmatpush.bf16.msra.mxu0 %v735
    %865 = vmatpush.bf16.msra.mxu0 %v734
    %866 = vmatpush.bf16.msra.mxu0 %v733
    %867 = vmatpush.bf16.msra.mxu0 %v732
    %868 = vmatmul.bf16.gmra.mxu0 %v179
    %v869 = vpop.f32.mrf.mxu0
    %v870 = vadd.f32 0.0, %v869
    %v871 = vpop.f32.mrf.mxu0
    %v872 = vadd.f32 0.0, %v871
    %873 = vdwg.mxu0
    %874 = vmatpush.bf16.msra.mxu0 %v747
    %875 = vmatpush.bf16.msra.mxu0 %v746
    %876 = vmatpush.bf16.msra.mxu0 %v745
    %877 = vmatpush.bf16.msra.mxu0 %v744
    %878 = vmatpush.bf16.msra.mxu0 %v743
    %879 = vmatpush.bf16.msra.mxu0 %v742
    %880 = vmatpush.bf16.msra.mxu0 %v741
    %881 = vmatpush.bf16.msra.mxu0 %v740
    %882 = vmatmul.bf16.gmra.mxu0 %v180
    %v883 = vpop.f32.mrf.mxu0
    %v884 = vadd.f32 %v870, %v883
    %v885 = vpop.f32.mrf.mxu0
    %v886 = vadd.f32 %v872, %v885
    %887 = vdwg.mxu0
    %888 = vmatpush.bf16.msra.mxu0 %v755
    %889 = vmatpush.bf16.msra.mxu0 %v754
    %890 = vmatpush.bf16.msra.mxu0 %v753
    %891 = vmatpush.bf16.msra.mxu0 %v752
    %892 = vmatpush.bf16.msra.mxu0 %v751
    %893 = vmatpush.bf16.msra.mxu0 %v750
    %894 = vmatpush.bf16.msra.mxu0 %v749
    %895 = vmatpush.bf16.msra.mxu0 %v748
    %896 = vmatmul.bf16.gmra.mxu0 %v181
    %v897 = vpop.f32.mrf.mxu0
    %v898 = vadd.f32 %v884, %v897
    %v899 = vpop.f32.mrf.mxu0
    %v900 = vadd.f32 %v886, %v899
    %901 = vdwg.mxu0
    %902 = vmatpush.bf16.msra.mxu0 %v763
    %903 = vmatpush.bf16.msra.mxu0 %v762
    %904 = vmatpush.bf16.msra.mxu0 %v761
    %905 = vmatpush.bf16.msra.mxu0 %v760
    %906 = vmatpush.bf16.msra.mxu0 %v759
    %907 = vmatpush.bf16.msra.mxu0 %v758
    %908 = vmatpush.bf16.msra.mxu0 %v757
    %909 = vmatpush.bf16.msra.mxu0 %v756
    %910 = vmatmul.bf16.gmra.mxu0 %v182
    %v911 = vpop.f32.mrf.mxu0
    %v912 = vadd.f32 %v898, %v911
    %v913 = vpop.f32.mrf.mxu0
    %v914 = vadd.f32 %v900, %v913
    %915 = vdwg.mxu0
    %916 = vmatpush.bf16.msra.mxu0 %v771
    %917 = vmatpush.bf16.msra.mxu0 %v770
    %918 = vmatpush.bf16.msra.mxu0 %v769
    %919 = vmatpush.bf16.msra.mxu0 %v768
    %920 = vmatpush.bf16.msra.mxu0 %v767
    %921 = vmatpush.bf16.msra.mxu0 %v766
    %922 = vmatpush.bf16.msra.mxu0 %v765
    %923 = vmatpush.bf16.msra.mxu0 %v764
    %924 = vmatmul.bf16.gmra.mxu0 %v183
    %v925 = vpop.f32.mrf.mxu0
    %v926 = vadd.f32 %v912, %v925
    %v927 = vpop.f32.mrf.mxu0
    %v928 = vadd.f32 %v914, %v927
    %929 = vdwg.mxu0
    %930 = vmatpush.bf16.msra.mxu0 %v779
    %931 = vmatpush.bf16.msra.mxu0 %v778
    %932 = vmatpush.bf16.msra.mxu0 %v777
    %933 = vmatpush.bf16.msra.mxu0 %v776
    %934 = vmatpush.bf16.msra.mxu0 %v775
    %935 = vmatpush.bf16.msra.mxu0 %v774
    %936 = vmatpush.bf16.msra.mxu0 %v773
    %937 = vmatpush.bf16.msra.mxu0 %v772
    %938 = vmatmul.bf16.gmra.mxu0 %v184
    %v939 = vpop.f32.mrf.mxu0
    %v940 = vadd.f32 %v926, %v939
    %v941 = vpop.f32.mrf.mxu0
    %v942 = vadd.f32 %v928, %v941
    %943 = vdwg.mxu0
    %944 = vmatpush.bf16.msra.mxu0 %v787
    %945 = vmatpush.bf16.msra.mxu0 %v786
    %946 = vmatpush.bf16.msra.mxu0 %v785
    %947 = vmatpush.bf16.msra.mxu0 %v784
    %948 = vmatpush.bf16.msra.mxu0 %v783
    %949 = vmatpush.bf16.msra.mxu0 %v782
    %950 = vmatpush.bf16.msra.mxu0 %v781
    %951 = vmatpush.bf16.msra.mxu0 %v780
    %952 = vmatmul.bf16.gmra.mxu0 %v185
    %v953 = vpop.f32.mrf.mxu0
    %v954 = vadd.f32 %v940, %v953
    %v955 = vpop.f32.mrf.mxu0
    %v956 = vadd.f32 %v942, %v955
    %957 = vdwg.mxu0
    %958 = vmatpush.bf16.msra.mxu0 %v795
    %959 = vmatpush.bf16.msra.mxu0 %v794
    %960 = vmatpush.bf16.msra.mxu0 %v793
    %961 = vmatpush.bf16.msra.mxu0 %v792
    %962 = vmatpush.bf16.msra.mxu0 %v791
    %963 = vmatpush.bf16.msra.mxu0 %v790
    %964 = vmatpush.bf16.msra.mxu0 %v789
    %965 = vmatpush.bf16.msra.mxu0 %v788
    %966 = vmatmul.bf16.gmra.mxu0 %v186
    %v967 = vpop.f32.mrf.mxu0
    %v968 = vadd.f32 %v954, %v967
    %v969 = vpop.f32.mrf.mxu0
    %v970 = vadd.f32 %v956, %v969
    %971 = vdwg.mxu0
    %v972 = vadd.f32 %v474, %v968
    %v973 = vadd.f32 %v475, %v970
    %974 = vst [vmem:[#allocation2] sm:$0xff] %v972
    %975 = vst [vmem:[#allocation2 + $0x8] sm:$0xff] %v973
    %v976 = vld [vmem:[#allocation2] sm:$0xff]
    %v977 = vld [vmem:[#allocation2 + $0x8] sm:$0xff]
    %v1106 = vunpack.c.l.b16 %v346
    %v1107 = vunpack.c.l.b16 %v347
    %v1108 = vunpack.c.l.b16 %v348
    %v1109 = vunpack.c.l.b16 %v349
    %v1110 = vunpack.c.l.b16 %v350
    %v1111 = vunpack.c.l.b16 %v351
    %v1112 = vunpack.c.l.b16 %v352
    %v1113 = vunpack.c.l.b16 %v353
    %v1114 = vunpack.c.l.b16 %v354
    %v1115 = vunpack.c.l.b16 %v355
    %v1116 = vunpack.c.l.b16 %v356
    %v1117 = vunpack.c.l.b16 %v357
    %v1118 = vunpack.c.l.b16 %v358
    %v1119 = vunpack.c.l.b16 %v359
    %v1120 = vunpack.c.l.b16 %v360
    %v1121 = vunpack.c.l.b16 %v361
    %v1122 = vunpack.c.l.b16 %v362
    %v1123 = vunpack.c.l.b16 %v363
    %v1124 = vunpack.c.l.b16 %v364
    %v1125 = vunpack.c.l.b16 %v365
    %v1126 = vunpack.c.l.b16 %v366
    %v1127 = vunpack.c.l.b16 %v367
    %v1128 = vunpack.c.l.b16 %v368
    %v1129 = vunpack.c.l.b16 %v369
    %v1130 = vunpack.c.l.b16 %v370
    %v1131 = vunpack.c.l.b16 %v371
    %v1132 = vunpack.c.l.b16 %v372
    %v1133 = vunpack.c.l.b16 %v373
    %v1134 = vunpack.c.l.b16 %v374
    %v1135 = vunpack.c.l.b16 %v375
    %v1136 = vunpack.c.l.b16 %v376
    %v1137 = vunpack.c.l.b16 %v377
    %v1138 = vunpack.c.l.b16 %v378
    %v1139 = vunpack.c.l.b16 %v379
    %v1140 = vunpack.c.l.b16 %v380
    %v1141 = vunpack.c.l.b16 %v381
    %v1142 = vunpack.c.l.b16 %v382
    %v1143 = vunpack.c.l.b16 %v383
    %v1144 = vunpack.c.l.b16 %v384
    %v1145 = vunpack.c.l.b16 %v385
    %v1146 = vunpack.c.l.b16 %v386
    %v1147 = vunpack.c.l.b16 %v387
    %v1148 = vunpack.c.l.b16 %v388
    %v1149 = vunpack.c.l.b16 %v389
    %v1150 = vunpack.c.l.b16 %v390
    %v1151 = vunpack.c.l.b16 %v391
    %v1152 = vunpack.c.l.b16 %v392
    %v1153 = vunpack.c.l.b16 %v393
    %v1154 = vunpack.c.l.b16 %v394
    %v1155 = vunpack.c.l.b16 %v395
    %v1156 = vunpack.c.l.b16 %v396
    %v1157 = vunpack.c.l.b16 %v397
    %v1158 = vunpack.c.l.b16 %v398
    %v1159 = vunpack.c.l.b16 %v399
    %v1160 = vunpack.c.l.b16 %v400
    %v1161 = vunpack.c.l.b16 %v401
    %v1162 = vunpack.c.l.b16 %v402
    %v1163 = vunpack.c.l.b16 %v403
    %v1164 = vunpack.c.l.b16 %v404
    %v1165 = vunpack.c.l.b16 %v405
    %v1166 = vunpack.c.l.b16 %v406
    %v1167 = vunpack.c.l.b16 %v407
    %v1168 = vunpack.c.l.b16 %v408
    %v1169 = vunpack.c.l.b16 %v409
    %v1170 = vunpack.c.l.b16 %v410
    %v1171 = vunpack.c.l.b16 %v411
    %v1172 = vunpack.c.l.b16 %v412
    %v1173 = vunpack.c.l.b16 %v413
    %v1174 = vunpack.c.l.b16 %v414
    %v1175 = vunpack.c.l.b16 %v415
    %v1176 = vunpack.c.l.b16 %v416
    %v1177 = vunpack.c.l.b16 %v417
    %v1178 = vunpack.c.l.b16 %v418
    %v1179 = vunpack.c.l.b16 %v419
    %v1180 = vunpack.c.l.b16 %v420
    %v1181 = vunpack.c.l.b16 %v421
    %v1182 = vunpack.c.l.b16 %v422
    %v1183 = vunpack.c.l.b16 %v423
    %v1184 = vunpack.c.l.b16 %v424
    %v1185 = vunpack.c.l.b16 %v425
    %v1186 = vunpack.c.l.b16 %v426
    %v1187 = vunpack.c.l.b16 %v427
    %v1188 = vunpack.c.l.b16 %v428
    %v1189 = vunpack.c.l.b16 %v429
    %v1190 = vunpack.c.l.b16 %v430
    %v1191 = vunpack.c.l.b16 %v431
    %v1192 = vunpack.c.l.b16 %v432
    %v1193 = vunpack.c.l.b16 %v433
    %v1194 = vunpack.c.l.b16 %v434
    %v1195 = vunpack.c.l.b16 %v435
    %v1196 = vunpack.c.l.b16 %v436
    %v1197 = vunpack.c.l.b16 %v437
    %v1198 = vunpack.c.l.b16 %v438
    %v1199 = vunpack.c.l.b16 %v439
    %v1200 = vunpack.c.l.b16 %v440
    %v1201 = vunpack.c.l.b16 %v441
    %v1202 = vunpack.c.l.b16 %v442
    %v1203 = vunpack.c.l.b16 %v443
    %v1204 = vunpack.c.l.b16 %v444
    %v1205 = vunpack.c.l.b16 %v445
    %v1206 = vunpack.c.l.b16 %v446
    %v1207 = vunpack.c.l.b16 %v447
    %v1208 = vunpack.c.l.b16 %v448
    %v1209 = vunpack.c.l.b16 %v449
    %v1210 = vunpack.c.l.b16 %v450
    %v1211 = vunpack.c.l.b16 %v451
    %v1212 = vunpack.c.l.b16 %v452
    %v1213 = vunpack.c.l.b16 %v453
    %v1214 = vunpack.c.l.b16 %v454
    %v1215 = vunpack.c.l.b16 %v455
    %v1216 = vunpack.c.l.b16 %v456
    %v1217 = vunpack.c.l.b16 %v457
    %v1218 = vunpack.c.l.b16 %v458
    %v1219 = vunpack.c.l.b16 %v459
    %v1220 = vunpack.c.l.b16 %v460
    %v1221 = vunpack.c.l.b16 %v461
    %v1222 = vunpack.c.l.b16 %v462
    %v1223 = vunpack.c.l.b16 %v463
    %v1224 = vunpack.c.l.b16 %v464
    %v1225 = vunpack.c.l.b16 %v465
    %v1226 = vunpack.c.l.b16 %v466
    %v1227 = vunpack.c.l.b16 %v467
    %v1228 = vunpack.c.l.b16 %v468
    %v1229 = vunpack.c.l.b16 %v469
    %v1230 = vunpack.c.l.b16 %v470
    %v1231 = vunpack.c.l.b16 %v471
    %v1232 = vunpack.c.l.b16 %v472
    %v1233 = vunpack.c.l.b16 %v473
    %v1234 = vpack.c.b16 %v1107, %v1106
    %v1235 = vpack.c.b16 %v1109, %v1108
    %v1236 = vpack.c.b16 %v1111, %v1110
    %v1237 = vpack.c.b16 %v1113, %v1112
    %v1238 = vpack.c.b16 %v1115, %v1114
    %v1239 = vpack.c.b16 %v1117, %v1116
    %v1240 = vpack.c.b16 %v1119, %v1118
    %v1241 = vpack.c.b16 %v1121, %v1120
    %v1242 = vpack.c.b16 %v1123, %v1122
    %v1243 = vpack.c.b16 %v1125, %v1124
    %v1244 = vpack.c.b16 %v1127, %v1126
    %v1245 = vpack.c.b16 %v1129, %v1128
    %v1246 = vpack.c.b16 %v1131, %v1130
    %v1247 = vpack.c.b16 %v1133, %v1132
    %v1248 = vpack.c.b16 %v1135, %v1134
    %v1249 = vpack.c.b16 %v1137, %v1136
    %v1250 = vpack.c.b16 %v1139, %v1138
    %v1251 = vpack.c.b16 %v1141, %v1140
    %v1252 = vpack.c.b16 %v1143, %v1142
    %v1253 = vpack.c.b16 %v1145, %v1144
    %v1254 = vpack.c.b16 %v1147, %v1146
    %v1255 = vpack.c.b16 %v1149, %v1148
    %v1256 = vpack.c.b16 %v1151, %v1150
    %v1257 = vpack.c.b16 %v1153, %v1152
    %v1258 = vpack.c.b16 %v1155, %v1154
    %v1259 = vpack.c.b16 %v1157, %v1156
    %v1260 = vpack.c.b16 %v1159, %v1158
    %v1261 = vpack.c.b16 %v1161, %v1160
    %v1262 = vpack.c.b16 %v1163, %v1162
    %v1263 = vpack.c.b16 %v1165, %v1164
    %v1264 = vpack.c.b16 %v1167, %v1166
    %v1265 = vpack.c.b16 %v1169, %v1168
    %v1266 = vpack.c.b16 %v1171, %v1170
    %v1267 = vpack.c.b16 %v1173, %v1172
    %v1268 = vpack.c.b16 %v1175, %v1174
    %v1269 = vpack.c.b16 %v1177, %v1176
    %v1270 = vpack.c.b16 %v1179, %v1178
    %v1271 = vpack.c.b16 %v1181, %v1180
    %v1272 = vpack.c.b16 %v1183, %v1182
    %v1273 = vpack.c.b16 %v1185, %v1184
    %v1274 = vpack.c.b16 %v1187, %v1186
    %v1275 = vpack.c.b16 %v1189, %v1188
    %v1276 = vpack.c.b16 %v1191, %v1190
    %v1277 = vpack.c.b16 %v1193, %v1192
    %v1278 = vpack.c.b16 %v1195, %v1194
    %v1279 = vpack.c.b16 %v1197, %v1196
    %v1280 = vpack.c.b16 %v1199, %v1198
    %v1281 = vpack.c.b16 %v1201, %v1200
    %v1282 = vpack.c.b16 %v1203, %v1202
    %v1283 = vpack.c.b16 %v1205, %v1204
    %v1284 = vpack.c.b16 %v1207, %v1206
    %v1285 = vpack.c.b16 %v1209, %v1208
    %v1286 = vpack.c.b16 %v1211, %v1210
    %v1287 = vpack.c.b16 %v1213, %v1212
    %v1288 = vpack.c.b16 %v1215, %v1214
    %v1289 = vpack.c.b16 %v1217, %v1216
    %v1290 = vpack.c.b16 %v1219, %v1218
    %v1291 = vpack.c.b16 %v1221, %v1220
    %v1292 = vpack.c.b16 %v1223, %v1222
    %v1293 = vpack.c.b16 %v1225, %v1224
    %v1294 = vpack.c.b16 %v1227, %v1226
    %v1295 = vpack.c.b16 %v1229, %v1228
    %v1296 = vpack.c.b16 %v1231, %v1230
    %v1297 = vpack.c.b16 %v1233, %v1232
    %1362 = vmatpush.bf16.msra.mxu0 %v1241
    %1363 = vmatpush.bf16.msra.mxu0 %v1240
    %1364 = vmatpush.bf16.msra.mxu0 %v1239
    %1365 = vmatpush.bf16.msra.mxu0 %v1238
    %1366 = vmatpush.bf16.msra.mxu0 %v1237
    %1367 = vmatpush.bf16.msra.mxu0 %v1236
    %1368 = vmatpush.bf16.msra.mxu0 %v1235
    %1369 = vmatpush.bf16.msra.mxu0 %v1234
    %1370 = vmatmul.bf16.gmra.mxu0 %v203
    %v1371 = vpop.f32.mrf.mxu0
    %v1372 = vadd.f32 0.0, %v1371
    %v1373 = vpop.f32.mrf.mxu0
    %v1374 = vadd.f32 0.0, %v1373
    %1375 = vdwg.mxu0
    %1376 = vmatpush.bf16.msra.mxu0 %v1249
    %1377 = vmatpush.bf16.msra.mxu0 %v1248
    %1378 = vmatpush.bf16.msra.mxu0 %v1247
    %1379 = vmatpush.bf16.msra.mxu0 %v1246
    %1380 = vmatpush.bf16.msra.mxu0 %v1245
    %1381 = vmatpush.bf16.msra.mxu0 %v1244
    %1382 = vmatpush.bf16.msra.mxu0 %v1243
    %1383 = vmatpush.bf16.msra.mxu0 %v1242
    %1384 = vmatmul.bf16.gmra.mxu0 %v204
    %v1385 = vpop.f32.mrf.mxu0
    %v1386 = vadd.f32 %v1372, %v1385
    %v1387 = vpop.f32.mrf.mxu0
    %v1388 = vadd.f32 %v1374, %v1387
    %1389 = vdwg.mxu0
    %1390 = vmatpush.bf16.msra.mxu0 %v1257
    %1391 = vmatpush.bf16.msra.mxu0 %v1256
    %1392 = vmatpush.bf16.msra.mxu0 %v1255
    %1393 = vmatpush.bf16.msra.mxu0 %v1254
    %1394 = vmatpush.bf16.msra.mxu0 %v1253
    %1395 = vmatpush.bf16.msra.mxu0 %v1252
    %1396 = vmatpush.bf16.msra.mxu0 %v1251
    %1397 = vmatpush.bf16.msra.mxu0 %v1250
    %1398 = vmatmul.bf16.gmra.mxu0 %v205
    %v1399 = vpop.f32.mrf.mxu0
    %v1400 = vadd.f32 %v1386, %v1399
    %v1401 = vpop.f32.mrf.mxu0
    %v1402 = vadd.f32 %v1388, %v1401
    %1403 = vdwg.mxu0
    %1404 = vmatpush.bf16.msra.mxu0 %v1265
    %1405 = vmatpush.bf16.msra.mxu0 %v1264
    %1406 = vmatpush.bf16.msra.mxu0 %v1263
    %1407 = vmatpush.bf16.msra.mxu0 %v1262
    %1408 = vmatpush.bf16.msra.mxu0 %v1261
    %1409 = vmatpush.bf16.msra.mxu0 %v1260
    %1410 = vmatpush.bf16.msra.mxu0 %v1259
    %1411 = vmatpush.bf16.msra.mxu0 %v1258
    %1412 = vmatmul.bf16.gmra.mxu0 %v206
    %v1413 = vpop.f32.mrf.mxu0
    %v1414 = vadd.f32 %v1400, %v1413
    %v1415 = vpop.f32.mrf.mxu0
    %v1416 = vadd.f32 %v1402, %v1415
    %1417 = vdwg.mxu0
    %1418 = vmatpush.bf16.msra.mxu0 %v1273
    %1419 = vmatpush.bf16.msra.mxu0 %v1272
    %1420 = vmatpush.bf16.msra.mxu0 %v1271
    %1421 = vmatpush.bf16.msra.mxu0 %v1270
    %1422 = vmatpush.bf16.msra.mxu0 %v1269
    %1423 = vmatpush.bf16.msra.mxu0 %v1268
    %1424 = vmatpush.bf16.msra.mxu0 %v1267
    %1425 = vmatpush.bf16.msra.mxu0 %v1266
    %1426 = vmatmul.bf16.gmra.mxu0 %v207
    %v1427 = vpop.f32.mrf.mxu0
    %v1428 = vadd.f32 %v1414, %v1427
    %v1429 = vpop.f32.mrf.mxu0
    %v1430 = vadd.f32 %v1416, %v1429
    %1431 = vdwg.mxu0
    %1432 = vmatpush.bf16.msra.mxu0 %v1281
    %1433 = vmatpush.bf16.msra.mxu0 %v1280
    %1434 = vmatpush.bf16.msra.mxu0 %v1279
    %1435 = vmatpush.bf16.msra.mxu0 %v1278
    %1436 = vmatpush.bf16.msra.mxu0 %v1277
    %1437 = vmatpush.bf16.msra.mxu0 %v1276
    %1438 = vmatpush.bf16.msra.mxu0 %v1275
    %1439 = vmatpush.bf16.msra.mxu0 %v1274
    %1440 = vmatmul.bf16.gmra.mxu0 %v208
    %v1441 = vpop.f32.mrf.mxu0
    %v1442 = vadd.f32 %v1428, %v1441
    %v1443 = vpop.f32.mrf.mxu0
    %v1444 = vadd.f32 %v1430, %v1443
    %1445 = vdwg.mxu0
    %1446 = vmatpush.bf16.msra.mxu0 %v1289
    %1447 = vmatpush.bf16.msra.mxu0 %v1288
    %1448 = vmatpush.bf16.msra.mxu0 %v1287
    %1449 = vmatpush.bf16.msra.mxu0 %v1286
    %1450 = vmatpush.bf16.msra.mxu0 %v1285
    %1451 = vmatpush.bf16.msra.mxu0 %v1284
    %1452 = vmatpush.bf16.msra.mxu0 %v1283
    %1453 = vmatpush.bf16.msra.mxu0 %v1282
    %1454 = vmatmul.bf16.gmra.mxu0 %v209
    %v1455 = vpop.f32.mrf.mxu0
    %v1456 = vadd.f32 %v1442, %v1455
    %v1457 = vpop.f32.mrf.mxu0
    %v1458 = vadd.f32 %v1444, %v1457
    %1459 = vdwg.mxu0
    %1460 = vmatpush.bf16.msra.mxu0 %v1297
    %1461 = vmatpush.bf16.msra.mxu0 %v1296
    %1462 = vmatpush.bf16.msra.mxu0 %v1295
    %1463 = vmatpush.bf16.msra.mxu0 %v1294
    %1464 = vmatpush.bf16.msra.mxu0 %v1293
    %1465 = vmatpush.bf16.msra.mxu0 %v1292
    %1466 = vmatpush.bf16.msra.mxu0 %v1291
    %1467 = vmatpush.bf16.msra.mxu0 %v1290
    %1468 = vmatmul.bf16.gmra.mxu0 %v210
    %v1469 = vpop.f32.mrf.mxu0
    %v1470 = vadd.f32 %v1456, %v1469
    %v1471 = vpop.f32.mrf.mxu0
    %v1472 = vadd.f32 %v1458, %v1471
    %1473 = vdwg.mxu0
    %v1474 = vadd.f32 %v976, %v1470
    %v1475 = vadd.f32 %v977, %v1472
    %1476 = vst [vmem:[#allocation2] sm:$0xff] %v1474
    %1477 = vst [vmem:[#allocation2 + $0x8] sm:$0xff] %v1475
    // Predicated region
    $region74: #{tpu_custom_call.1} parent=1 // pred_check
      %p1478 = pneg %p133
    $region75: #{tpu_custom_call.1} parent=1 // pred_check_branch
      %1480 = sbr.rel (%p1478) target = $region77
    $region76: #{tpu_custom_call.1} parent=1 // pred_region
      %v1481 = vld [vmem:[#allocation2] sm:$0xff]
      %v1482 = vld [vmem:[#allocation2 + $0x8] sm:$0xff]
      %v1483 = vmax.f32 %v1481, 0.0
      %v1484 = vmax.f32 %v1482, 0.0
      %v1485 = vpack.c.bf16 %v1484, %v1483
      %v1486 = vld [vmem:[#allocation11] sm:$0xf]
      %v1487 = vld [vmem:[#allocation11 + $0x4] sm:$0xf]
      %v1488 = vld [vmem:[#allocation11 + $0x8] sm:$0xf]
      %v1489 = vld [vmem:[#allocation11 + $0xc] sm:$0xf]
      %v1490 = vld [vmem:[#allocation11 + $0x10] sm:$0xf]
      %v1491 = vld [vmem:[#allocation11 + $0x14] sm:$0xf]
      %v1492 = vld [vmem:[#allocation11 + $0x18] sm:$0xf]
      %v1493 = vld [vmem:[#allocation11 + $0x1c] sm:$0xf]
      %v1494 = vld [vmem:[#allocation11 + $0x20] sm:$0xf]
      %v1495 = vld [vmem:[#allocation11 + $0x24] sm:$0xf]
      %v1496 = vld [vmem:[#allocation11 + $0x28] sm:$0xf]
      %v1497 = vld [vmem:[#allocation11 + $0x2c] sm:$0xf]
      %v1498 = vld [vmem:[#allocation11 + $0x30] sm:$0xf]
      %v1499 = vld [vmem:[#allocation11 + $0x34] sm:$0xf]
      %v1500 = vld [vmem:[#allocation11 + $0x38] sm:$0xf]
      %v1501 = vld [vmem:[#allocation11 + $0x3c] sm:$0xf]
      %v1502 = vld [vmem:[%s8] sm:$0x1]
      %v1504 = vperm.slane %v1502, 0
      %v1522 = vunpack.c.l.b16 %v1486
      %v1523 = vunpack.c.l.b16 %v1487
      %v1524 = vunpack.c.l.b16 %v1488
      %v1525 = vunpack.c.l.b16 %v1489
      %v1526 = vunpack.c.l.b16 %v1490
      %v1527 = vunpack.c.l.b16 %v1491
      %v1528 = vunpack.c.l.b16 %v1492
      %v1529 = vunpack.c.l.b16 %v1493
      %v1530 = vunpack.c.l.b16 %v1494
      %v1531 = vunpack.c.l.b16 %v1495
      %v1532 = vunpack.c.l.b16 %v1496
      %v1533 = vunpack.c.l.b16 %v1497
      %v1534 = vunpack.c.l.b16 %v1498
      %v1535 = vunpack.c.l.b16 %v1499
      %v1536 = vunpack.c.l.b16 %v1500
      %v1537 = vunpack.c.l.b16 %v1501
      %v1538 = vpack.c.b16 %v1523, %v1522
      %v1539 = vpack.c.b16 %v1525, %v1524
      %v1540 = vpack.c.b16 %v1527, %v1526
      %v1541 = vpack.c.b16 %v1529, %v1528
      %v1542 = vpack.c.b16 %v1531, %v1530
      %v1543 = vpack.c.b16 %v1533, %v1532
      %v1544 = vpack.c.b16 %v1535, %v1534
      %v1545 = vpack.c.b16 %v1537, %v1536
      %1554 = vmatpush.bf16.msra.mxu0 %v1545
      %1555 = vmatpush.bf16.msra.mxu0 %v1544
      %1556 = vmatpush.bf16.msra.mxu0 %v1543
      %1557 = vmatpush.bf16.msra.mxu0 %v1542
      %1558 = vmatpush.bf16.msra.mxu0 %v1541
      %1559 = vmatpush.bf16.msra.mxu0 %v1540
      %1560 = vmatpush.bf16.msra.mxu0 %v1539
      %1561 = vmatpush.bf16.msra.mxu0 %v1538
      %1562 = vmatmul.bf16.gmra.mxu0 %v1485
      %v1563 = vpop.f32.mrf.mxu0
      %v1564 = vadd.f32 %v1504, %v1563
      %v1565 = vpop.f32.mrf.mxu0
      %v1566 = vadd.f32 %v1504, %v1565
      %1567 = vdwg.mxu0
      %v1568 = vmax.f32 %v1564, 0.0
      %v1569 = vmax.f32 %v1566, 0.0
      %v1570 = vpack.c.bf16 %v1569, %v1568
      %v1571 = vld [vmem:[#allocation12] sm:$0xf]
      %v1572 = vld [vmem:[#allocation12 + $0x4] sm:$0xf]
      %v1573 = vld [vmem:[#allocation12 + $0x8] sm:$0xf]
      %v1574 = vld [vmem:[#allocation12 + $0xc] sm:$0xf]
      %v1575 = vld [vmem:[#allocation12 + $0x10] sm:$0xf]
      %v1576 = vld [vmem:[#allocation12 + $0x14] sm:$0xf]
      %v1577 = vld [vmem:[#allocation12 + $0x18] sm:$0xf]
      %v1578 = vld [vmem:[#allocation12 + $0x1c] sm:$0xf]
      %v1579 = vld [vmem:[#allocation12 + $0x20] sm:$0xf]
      %v1580 = vld [vmem:[#allocation12 + $0x24] sm:$0xf]
      %v1581 = vld [vmem:[#allocation12 + $0x28] sm:$0xf]
      %v1582 = vld [vmem:[#allocation12 + $0x2c] sm:$0xf]
      %v1583 = vld [vmem:[#allocation12 + $0x30] sm:$0xf]
      %v1584 = vld [vmem:[#allocation12 + $0x34] sm:$0xf]
      %v1585 = vld [vmem:[#allocation12 + $0x38] sm:$0xf]
      %v1586 = vld [vmem:[#allocation12 + $0x3c] sm:$0xf]
      %v1587 = vld [vmem:[%s10] sm:$0x1]
      %v1589 = vperm.slane %v1587, 0
      %v1607 = vunpack.c.l.b16 %v1571
      %v1608 = vunpack.c.l.b16 %v1572
      %v1609 = vunpack.c.l.b16 %v1573
      %v1610 = vunpack.c.l.b16 %v1574
      %v1611 = vunpack.c.l.b16 %v1575
      %v1612 = vunpack.c.l.b16 %v1576
      %v1613 = vunpack.c.l.b16 %v1577
      %v1614 = vunpack.c.l.b16 %v1578
      %v1615 = vunpack.c.l.b16 %v1579
      %v1616 = vunpack.c.l.b16 %v1580
      %v1617 = vunpack.c.l.b16 %v1581
      %v1618 = vunpack.c.l.b16 %v1582
      %v1619 = vunpack.c.l.b16 %v1583
      %v1620 = vunpack.c.l.b16 %v1584
      %v1621 = vunpack.c.l.b16 %v1585
      %v1622 = vunpack.c.l.b16 %v1586
      %v1623 = vpack.c.b16 %v1608, %v1607
      %v1624 = vpack.c.b16 %v1610, %v1609
      %v1625 = vpack.c.b16 %v1612, %v1611
      %v1626 = vpack.c.b16 %v1614, %v1613
      %v1627 = vpack.c.b16 %v1616, %v1615
      %v1628 = vpack.c.b16 %v1618, %v1617
      %v1629 = vpack.c.b16 %v1620, %v1619
      %v1630 = vpack.c.b16 %v1622, %v1621
      %1639 = vmatpush.bf16.msra.mxu0 %v1630
      %1640 = vmatpush.bf16.msra.mxu0 %v1629
      %1641 = vmatpush.bf16.msra.mxu0 %v1628
      %1642 = vmatpush.bf16.msra.mxu0 %v1627
      %1643 = vmatpush.bf16.msra.mxu0 %v1626
      %1644 = vmatpush.bf16.msra.mxu0 %v1625
      %1645 = vmatpush.bf16.msra.mxu0 %v1624
      %1646 = vmatpush.bf16.msra.mxu0 %v1623
      %1647 = vmatmul.bf16.gmra.mxu0 %v1570
      %v1648 = vpop.f32.mrf.mxu0
      %v1649 = vadd.f32 %v1589, %v1648
      %v1650 = vpop.f32.mrf.mxu0
      %v1651 = vadd.f32 %v1589, %v1650
      %1652 = vdwg.mxu0
      %v1653 = vmul.f32 %v1649, %v1649
      %v1654 = vmul.f32 %v1651, %v1651
      %1655 = vadd.xlane.f32.xlu0 %v1653
      %v1656 = vpop.xlane.xlu0 %1655
      %1657 = vadd.xlane.f32.xlu0 %v1654
      %v1658 = vpop.xlane.xlu0 %1657
      %v1659 = vmax.f32 %v1656, 1e-24
      %v1660 = vmax.f32 %v1658, 1e-24
      %v1661 = vrsqrt.pop %v1659
      %v1662 = vmul.f32 %v1661, %v1659
      %v1663 = vmul.f32 %v1662, %v1661
      %v1664 = vmul.f32 0.5, %v1663
      %v1665 = vsub.f32 1.5, %v1664
      %v1666 = vmul.f32 %v1661, %v1665
      %vm1667 = vweird.f32 %v1659
      %vm1668 = vweird.f32 %v1661
      %vm1669 = vmor %vm1667, %vm1668
      %v1670 = vsel %vm1669, %v1661, %v1666
      %v1671 = vrsqrt.pop %v1660
      %v1672 = vmul.f32 %v1671, %v1660
      %v1673 = vmul.f32 %v1672, %v1671
      %v1674 = vmul.f32 0.5, %v1673
      %v1675 = vsub.f32 1.5, %v1674
      %v1676 = vmul.f32 %v1671, %v1675
      %vm1677 = vweird.f32 %v1660
      %vm1678 = vweird.f32 %v1671
      %vm1679 = vmor %vm1677, %vm1678
      %v1680 = vsel %vm1679, %v1671, %v1676
      %v1681 = vmul.f32 %v1649, %v1670
      %v1682 = vmul.f32 %v1651, %v1680
      %1683 = vst [vmem:[#allocation14] sm:$0xff] %v1681
      %1684 = vst [vmem:[#allocation14 + $0x8] sm:$0xff] %v1682
    $region77: #{tpu_custom_call.1} parent=1 // pred_fallthru
      _
    // Predicated region
    $region78: #{tpu_custom_call.1} parent=1 // pred_check
      _
    $region79: #{tpu_custom_call.1} parent=1 // pred_check_branch
      %1686 = sbr.rel (0) target = $region81
    $region80: #{tpu_custom_call.1} parent=1 // pred_region
      %1688 = vsyncadd [#allocation5], 0
      %s1689 = sshll.u32 [#allocation14], 4
      %s1690 = int_to_ptr.vmem [resolvable:$true] %s1689
      %s1691 = sshll.u32 %s11, 4
      %s1692 = int_to_ptr.hbm [resolvable:$true] %s1691
      %1697 = dma.vmem_to_hbm [thread:$0]  %s1690, 256, %s1692, [#allocation5], 128, 128, 8
    $region81: #{tpu_custom_call.1} parent=1 // pred_fallthru
      _
    // Predicated region
    $region82: #{tpu_custom_call.1} parent=1 // pred_check
      _
    $region83: #{tpu_custom_call.1} parent=1 // pred_check_branch
      %1699 = sbr.rel (0) target = $region85
    $region84: #{tpu_custom_call.1} parent=1 // pred_region
      %1701 = dma.done [#allocation5], 256
    $region85: #{tpu_custom_call.1} parent=1 // pred_fallthru
      _
    %1702 = vsyncpa [#allocation4], 1
    %1703 = vsyncpa [#allocation7], 1
    %1704 = vsyncpa [#allocation10], 1
    %1705 = vsyncpa [#allocation13], 1
    %1706 = vsyncpa [#allocation5], 1

</llo_original>
